<compile_context>
chip_gen: v5e
topology: v5e:2x2
jax: 0.10.0
libtpu: 0.0.40
codegen_flags: <defaults>
</compile_context>

<pallas_src>
import functools
import math

import jax
import jax.numpy as jnp
from jax.experimental import pallas as pl
from jax.experimental.pallas import tpu as pltpu

# MXU operand dtype (accumulation is always f32).  Set to jnp.float32 for exact f32 parity.
COMPUTE_DTYPE = jnp.bfloat16


# --------------------------------------------------------------------------------------
# In-kernel helpers
# --------------------------------------------------------------------------------------

def _gelu_tanh(x):
    """tanh-approximate GELU (one EUP tanh + a few VALU ops).

    # TODO(synk): torch nn.GELU default is the exact erf form; the tanh approximation
    # differs by <~1e-3 absolute, below the bf16-matmul parity bar of this port.
    """
    c = 0.7978845608028654  # sqrt(2/pi)
    return 0.5 * x * (1.0 + jnp.tanh(c * (x + 0.044715 * x * x * x)))


# --------------------------------------------------------------------------------------
# One fused Pallas kernel: both PatchTST backbones x BC tiles, grid=(2, n_bc_tiles)
# --------------------------------------------------------------------------------------

def _backbone_pair_kernel(emb_ref, head_w_ref, head_b_ref, *rest,
                          n_heads, useatt, bn_scale, tile_bc, patch_num):
    *layer_refs, out_ref = rest
    n_layers = len(layer_refs) // 8

    S = patch_num
    BCt = tile_bc
    D = emb_ref.shape[2]
    H = n_heads
    dh = D // H
    scale = float(dh) ** -0.5
    cd = head_w_ref.dtype                      # MXU operand (compute) dtype
    R = BCt * S

    # residual stream stays f32; bf16 shadows are made once per matmul input
    src = emb_ref[0]                                                       # [R, D] f32

    prev_scores = None                          # res_attention: cumulative raw scores
    for l in range(n_layers):
        (wqkv_r, bqkv_r, wo_r, bo_r,
         ff1_r, bff1_r, ff2_r, bff2_r) = layer_refs[8 * l:8 * l + 8]

        # fused Q|K|V projection: one [R, D] @ [D, 3D] GEMM
        qkv = jnp.dot(src.astype(cd), wqkv_r[0],
                      preferred_element_type=jnp.float32) + bqkv_r[0]      # [R, 3D] f32

        if useatt:
            qkv3 = qkv.astype(cd).reshape(BCt, S, 3 * D)                   # split lead dims
            heads_out, new_scores = [], []
            for h in range(H):                   # H is small; each step is BC-batched
                c0 = h * dh
                q = qkv3[:, :, c0:c0 + dh]                                 # [BCt, S, dh]
                k = qkv3[:, :, D + c0:D + c0 + dh]
                v = qkv3[:, :, 2 * D + c0:2 * D + c0 + dh]
                s = jnp.einsum('bqd,bkd->bqk', q, k,
                               preferred_element_type=jnp.float32) * scale  # [BCt, S, S]
                if prev_scores is not None:
                    s = s + prev_scores[h]
                new_scores.append(s)
                s = s - jnp.max(s, axis=-1, keepdims=True)
                p = jnp.exp(s)
                p = p * pl.reciprocal(jnp.sum(p, axis=-1, keepdims=True), approx=True)
                heads_out.append(
                    jnp.einsum('bqk,bkd->bqd', p.astype(cd), v,
                               preferred_element_type=jnp.float32))        # [BCt, S, dh]
            prev_scores = new_scores
            # concat heads along lanes, one K=D GEMM for the output projection
            o = jnp.concatenate(heads_out, axis=-1).reshape(R, D)          # [R, D] f32
            o_proj = jnp.dot(o.astype(cd), wo_r[0],
                             preferred_element_type=jnp.float32) + bo_r[0]
        else:
            # TODO(synk): modified backbone source with useatt=False is not provided;
            # assume attention is bypassed and only V -> W_O is applied (as before).
            o_proj = jnp.dot(qkv[:, 2 * D:3 * D].astype(cd), wo_r[0],
                             preferred_element_type=jnp.float32) + bo_r[0]

        # residual + BatchNorm1d (eval, default running stats -> scalar 1/sqrt(1+eps))
        src = (src + o_proj) * bn_scale

        # position-wise FFN, residual + BatchNorm
        h1 = jnp.dot(src.astype(cd), ff1_r[0],
                     preferred_element_type=jnp.float32) + bff1_r[0]
        h1 = _gelu_tanh(h1)
        h2 = jnp.dot(h1.astype(cd), ff2_r[0],
                     preferred_element_type=jnp.float32) + bff2_r[0]
        src = (src + h2) * bn_scale

    # ---- flatten head: ONE dense GEMM [BCt, S*D] @ [S*D, P_pad] ------------------------
    # head_w rows were permuted at init so the (s, d) flatten order matches PyTorch's
    # (d_model, patch_num) flatten; the flatten itself is built from a leading-dim
    # reshape + lane concatenation (robust Mosaic ops, no minor-dim reshape needed).
    src3 = src.astype(cd).reshape(BCt, S, D)
    flat = jnp.concatenate([src3[:, s, :] for s in range(S)], axis=1)      # [BCt, S*D]
    out = jnp.dot(flat, head_w_ref[0],
                  preferred_element_type=jnp.float32) + head_b_ref[0]      # [BCt, P_pad]
    out_ref[0] = out.astype(out_ref.dtype)


# --------------------------------------------------------------------------------------
# VMEM budget / tiling / cost-estimate helpers
# --------------------------------------------------------------------------------------

def _layer_weight_bytes(D, dff, cd_bytes=2):
    return (D * 3 * D + D * D + D * dff + dff * D) * cd_bytes + (3 * D + D + dff + D) * 4


def _vmem_estimate_bytes(tile_bc, S, D, dff, H, P_pad, n_layers):
    R = tile_bc * S
    io = 2 * (R * D * 4 + tile_bc * P_pad * 4)            # emb + out, double-buffered
    w = n_layers * _layer_weight_bytes(D, dff) + S * D * P_pad * 2 + P_pad * 4
    acts = (R * D * 10                                     # src f32 + cd copies, o_proj
            + R * 3 * D * 6                                # qkv f32 + cd
            + 2 * H * tile_bc * S * S * 4                  # prev + new scores
            + R * dff * 6                                  # h1 f32 + cd
            + tile_bc * S * D * 6)                         # flatten
    return io + 2 * w + acts + (1 << 20)                   # + headroom


def _pick_tile_bc(BC, S, D, dff, H, P_pad, n_layers, budget_bytes=36 << 20):
    # valid tiles: divisors of BC that are multiples of 8 (lane/sublane-safe blocks),
    # plus BC itself (full-extent block is always legal).
    cands = sorted({t for t in range(8, BC + 1, 8) if BC % t == 0} | {BC}, reverse=True)
    for t in cands:
        if _vmem_estimate_bytes(t, S, D, dff, H, P_pad, n_layers) <= budget_bytes:
            return t
    return min(cands)


def _cost_estimate(BC, S, D, dff, H, P_pad, n_layers, useatt):
    R = BC * S
    dh = max(D // max(H, 1), 1)
    per_bk = n_layers * (2 * R * D * 3 * D + 2 * R * D * D + 4 * R * D * dff)
    if useatt:
        per_bk += n_layers * 4 * BC * H * S * S * dh
    per_bk += 2 * BC * S * D * P_pad
    flops = 2 * per_bk
    trans = 2 * n_layers * (BC * H * S * S + R * dff)
    w_bytes = n_layers * _layer_weight_bytes(D, dff) + S * D * P_pad * 2 + P_pad * 4
    bytes_acc = 2 * (R * D * 4 + BC * P_pad * 4) + 2 * w_bytes
    return pl.CostEstimate(flops=int(flops), transcendentals=int(trans),
                           bytes_accessed=int(bytes_acc))


# --------------------------------------------------------------------------------------
# Pallas wrapper
# --------------------------------------------------------------------------------------

def run_backbone_pair(emb2, sp, *, n_heads, useatt, patch_num):
    """Run both (res, trend) PatchTST backbones in a single pallas_call.

    emb2: [2, B*C*S, d_model] f32 (patch-embedded, pos-encoded activations).
    Returns [2, B*C, P_pad] f32 (pre-RevIN-denorm, lane-padded pred_len).
    """
    _, BCS, D = emb2.shape
    S = patch_num
    BC = BCS // S
    P_pad = sp["head_w"].shape[2]
    n_layers = len(sp["layers"])
    dff = sp["layers"][0]["ff1_w"].shape[2] if n_layers else D
    H = n_heads
    assert D % H == 0, "d_model must be divisible by n_heads"
    bn_scale = 1.0 / math.sqrt(1.0 + 1e-5)   # BatchNorm1d eval, default running stats

    tile_bc = _pick_tile_bc(BC, S, D, dff, H, P_pad, n_layers)
    n_tiles = BC // tile_bc

    inputs = [emb2, sp["head_w"], sp["head_b"]]
    for lyr in sp["layers"]:
        inputs += [lyr["wqkv_w"], lyr["wqkv_b"], lyr["wo_w"], lyr["wo_b"],
                   lyr["ff1_w"], lyr["ff1_b"], lyr["ff2_w"], lyr["ff2_b"]]

    def w_spec(a):
        # weights ignore the BC-tile grid axis -> stay resident across BC tiles
        return pl.BlockSpec((1,) + a.shape[1:], lambda m, j: (m, 0, 0))

    in_specs = [pl.BlockSpec((1, tile_bc * S, D), lambda m, j: (m, j, 0))]
    in_specs += [w_spec(a) for a in inputs[1:]]

    est = _vmem_estimate_bytes(tile_bc, S, D, dff, H, P_pad, n_layers)
    vmem_limit = int(min(max(est * 3 // 2, 32 << 20), 48 << 20))

    kernel = functools.partial(_backbone_pair_kernel, n_heads=H, useatt=useatt,
                               bn_scale=bn_scale, tile_bc=tile_bc, patch_num=S)

    return pl.pallas_call(
        kernel,
        out_shape=jax.ShapeDtypeStruct((2, BC, P_pad), jnp.float32),
        grid=(2, n_tiles),
        in_specs=in_specs,
        out_specs=pl.BlockSpec((1, tile_bc, P_pad), lambda m, j: (m, j, 0)),
        compiler_params=pltpu.CompilerParams(
            dimension_semantics=("parallel", "parallel"),
            vmem_limit_bytes=vmem_limit),
        cost_estimate=_cost_estimate(BC, S, D, dff, H, P_pad, n_layers, useatt),
    )(*inputs)


# --------------------------------------------------------------------------------------
# Plain-JAX glue (decomposition, RevIN statistics, unfold, patch embedding) — XLA-fused
# --------------------------------------------------------------------------------------

def series_decomp(x_blc, kernel_size=25):
    """Autoformer series_decomp: AvgPool1d over a replicate-padded series (prefix sums)."""
    B, L, C = x_blc.shape
    half = (kernel_size - 1) // 2
    front = jnp.repeat(x_blc[:, :1, :], half, axis=1)
    end = jnp.repeat(x_blc[:, -1:, :], half, axis=1)
    xp = jnp.concatenate([front, x_blc, end], axis=1)                 # [B, L+k-1, C]
    csum = jnp.cumsum(xp.astype(jnp.float32), axis=1)
    csum = jnp.concatenate([jnp.zeros((B, 1, C), jnp.float32), csum], axis=1)
    mean = (csum[:, kernel_size:kernel_size + L] - csum[:, :L]) * (1.0 / kernel_size)
    return x_blc - mean, mean


def revin_norm(z, w, b, eps=1e-5):
    # z: [B, C, L]; normalize per (b, c) over time; affine per channel.
    mean = jnp.mean(z, axis=-1, keepdims=True)
    std = jnp.sqrt(jnp.var(z, axis=-1, keepdims=True) + eps)
    zn = (z - mean) / std
    return zn * w[None, :, None] + b[None, :, None], mean, std


def revin_denorm(z, mean, std, w, b, eps=1e-5):
    zd = (z - b[None, :, None]) / (w[None, :, None] + eps * eps)
    return zd * std + mean


# --------------------------------------------------------------------------------------
# Full model forward (decomposition path of Model.forward)
# --------------------------------------------------------------------------------------

def model_forward(params, x, xmark, ymark, cfg):
    # x: [B, C, L]; xmark: [B, 5, L]; ymark: [B, 5, P]
    # TODO(synk): the modified PatchTST_backbone's covariate path (dynamic_proj /
    # embed_proj / target_proj) is not in the provided source; the standard PatchTST flow
    # is implemented, so that projection (whose output is unused there) is skipped.
    B, C, _ = x.shape
    P, S = cfg["pred_len"], cfg["patch_num"]
    plen, st = cfg["patch_len"], cfg["stride"]

    # x.permute(0,2,1) -> series_decomp over time -> permute back
    xp = jnp.transpose(x, (0, 2, 1))
    res_blc, trend_blc = series_decomp(xp, kernel_size=25)
    res_init = jnp.transpose(res_blc, (0, 2, 1))                      # [B, C, L]
    trend_init = jnp.transpose(trend_blc, (0, 2, 1))                  # [B, C, L]

    idx = jnp.arange(S)[:, None] * st + jnp.arange(plen)[None, :]     # unfold indices

    def prep(z, bp):
        zn, mean, std = revin_norm(z, bp["rev_w"], bp["rev_b"])
        # padding_patch == 'end': ReplicationPad1d((0, stride))
        zn = jnp.concatenate([zn, jnp.repeat(zn[:, :, -1:], st, axis=-1)], axis=-1)
        patches = zn[:, :, idx]                                       # [B, C, S, plen]
        return patches.reshape(B * C, S, plen), mean, std

    p_res, m_res, s_res = prep(res_init, params["res"])
    p_trend, m_trend, s_trend = prep(trend_init, params["trend"])

    sp = params["stacked"]
    patches2 = jnp.stack([p_res, p_trend], axis=0)                    # [2, BC, S, plen]
    # Patch embedding (W_P) + positional encoding in XLA: tiny f32 GEMM that keeps the
    # Pallas kernel's input lane-dense ([.., d_model]) instead of lane-padded patch_len.
    emb = (jnp.einsum('mbsp,mpd->mbsd', patches2, sp["wp_w"])
           + sp["wp_b"][:, None, None, :])
    if cfg["usepe"]:
        emb = emb + sp["w_pos"][:, None, :, :]
    emb2 = emb.reshape(2, B * C * S, -1).astype(jnp.float32)          # [2, BC*S, D]

    out2 = run_backbone_pair(emb2, sp, n_heads=cfg["n_heads"],
                             useatt=cfg["useatt"], patch_num=S)       # [2, BC, P_pad]
    out2 = out2[..., :P]                                              # drop lane padding

    out_res = revin_denorm(out2[0].reshape(B, C, P), m_res, s_res,
                           params["res"]["rev_w"], params["res"]["rev_b"])
    out_trend = revin_denorm(out2[1].reshape(B, C, P), m_trend, s_trend,
                             params["trend"]["rev_w"], params["trend"]["rev_b"])
    return out_res + out_trend                                        # [B, C, P]


# --------------------------------------------------------------------------------------
# Deterministic parameter init (PyTorch layout) + packing for the fused kernel
# --------------------------------------------------------------------------------------

def _w(key, shape, scale=0.05):
    return scale * jax.random.normal(key, shape, dtype=jnp.float32)


def init_backbone_params(key, cfg):
    D, S = cfg["d_model"], cfg["patch_num"]
    plen, P, C = cfg["patch_len"], cfg["pred_len"], cfg["enc_in"]
    keys = jax.random.split(key, 4)
    layers = []
    lkeys = jax.random.split(keys[0], cfg["n_layers"])
    for i in range(cfg["n_layers"]):
        k = jax.random.split(lkeys[i], 6)
        layers.append(dict(
            wq_w=_w(k[0], (D, D)), wq_b=jnp.zeros((D,), jnp.float32),
            wk_w=_w(k[1], (D, D)), wk_b=jnp.zeros((D,), jnp.float32),
            wv_w=_w(k[2], (D, D)), wv_b=jnp.zeros((D,), jnp.float32),
            wo_w=_w(k[3], (D, D)), wo_b=jnp.zeros((D,), jnp.float32),
            ff1_w=_w(k[4], (D, cfg["d_ff"])), ff1_b=jnp.zeros((cfg["d_ff"],), jnp.float32),
            ff2_w=_w(k[5], (cfg["d_ff"], D)), ff2_b=jnp.zeros((D,), jnp.float32),
        ))
    return dict(
        rev_w=jnp.ones((C,), jnp.float32), rev_b=jnp.zeros((C,), jnp.float32),
        wp_w=_w(keys[1], (plen, D)), wp_b=jnp.zeros((D,), jnp.float32),
        w_pos=0.02 * (2.0 * jax.random.uniform(keys[2], (S, D), jnp.float32) - 1.0),
        head_w=_w(keys[3], (D * S, P)), head_b=jnp.zeros((P,), jnp.float32),
        layers=layers,
    )


def stack_backbone_params(res_p, trend_p, compute_dtype=COMPUTE_DTYPE):
    """Pack both backbones along a leading res/trend axis for the fused kernel.

    Matmul weights are stored in the MXU compute dtype (bf16); biases stay f32.
    Q|K|V weights are concatenated into [D, 3D]; head_w rows are permuted from the torch
    (d_model, patch_num) flatten order to (patch_num, d_model) and its columns are
    zero-padded to a multiple of 128 so the kernel's output store is lane-dense.
    Done once at init -> zero per-call cost.
    """
    D = res_p["wp_w"].shape[1]
    S = res_p["w_pos"].shape[0]
    P = res_p["head_b"].shape[0]
    P_pad = ((P + 127) // 128) * 128

    def head_perm(hw):
        return hw.reshape(D, S, P).transpose(1, 0, 2).reshape(S * D, P)

    def pad_head_w(hw):
        return jnp.pad(head_perm(hw), ((0, 0), (0, P_pad - P)))

    def pad_head_b(hb):
        return jnp.pad(hb, (0, P_pad - P))

    def stack_w(a, b):
        return jnp.stack([a, b], axis=0).astype(compute_dtype)

    def stack_b(a, b):
        return jnp.stack([a[None, :], b[None, :]], axis=0).astype(jnp.float32)

    layers = []
    for lr, lt in zip(res_p["layers"], trend_p["layers"]):
        def cat_w(l):
            return jnp.concatenate([l["wq_w"], l["wk_w"], l["wv_w"]], axis=1)

        def cat_b(l):
            return jnp.concatenate([l["wq_b"], l["wk_b"], l["wv_b"]], axis=0)

        layers.append(dict(
            wqkv_w=stack_w(cat_w(lr), cat_w(lt)),
            wqkv_b=stack_b(cat_b(lr), cat_b(lt)),
            wo_w=stack_w(lr["wo_w"], lt["wo_w"]),
            wo_b=stack_b(lr["wo_b"], lt["wo_b"]),
            ff1_w=stack_w(lr["ff1_w"], lt["ff1_w"]),
            ff1_b=stack_b(lr["ff1_b"], lt["ff1_b"]),
            ff2_w=stack_w(lr["ff2_w"], lt["ff2_w"]),
            ff2_b=stack_b(lr["ff2_b"], lt["ff2_b"]),
        ))

    return dict(
        # XLA-side patch embedding params (kept f32 on purpose)
        wp_w=jnp.stack([res_p["wp_w"], trend_p["wp_w"]], axis=0),
        wp_b=jnp.stack([res_p["wp_b"], trend_p["wp_b"]], axis=0),
        w_pos=jnp.stack([res_p["w_pos"], trend_p["w_pos"]], axis=0),
        # kernel-side params
        head_w=stack_w(pad_head_w(res_p["head_w"]), pad_head_w(trend_p["head_w"])),
        head_b=stack_b(pad_head_b(res_p["head_b"]), pad_head_b(trend_p["head_b"])),
        layers=layers,
    )


if __name__ == "__main__":
    cfg = dict(
        enc_in=4, seq_len=16, pred_len=8, n_layers=1,
        d_model=32, d_ff=32, n_heads=2,
        patch_len=4, stride=4, usepe=True, useatt=True,
    )
    # padding_patch = 'end' -> one extra patch
    cfg["patch_num"] = (cfg["seq_len"] - cfg["patch_len"]) // cfg["stride"] + 1 + 1

    key = jax.random.PRNGKey(0)
    k_res, k_trend, kx, kxm, kym = jax.random.split(key, 5)
    res_params = init_backbone_params(k_res, cfg)
    trend_params = init_backbone_params(k_trend, cfg)
    params = dict(
        res=res_params,
        trend=trend_params,
        stacked=stack_backbone_params(res_params, trend_params),
    )

    B = 2
    x = jax.random.normal(kx, (B, cfg["enc_in"], cfg["seq_len"]), jnp.float32)
    xmark = jax.random.normal(kxm, (B, 5, cfg["seq_len"]), jnp.float32)
    ymark = jax.random.normal(kym, (B, 5, cfg["pred_len"]), jnp.float32)

    fwd = jax.jit(functools.partial(model_forward, cfg=cfg))
    out = jax.block_until_ready(fwd(params, x, xmark, ymark))
    assert out.shape == (B, cfg["enc_in"], cfg["pred_len"]), out.shape
    assert bool(jnp.all(jnp.isfinite(out)))
    print("KERNEL_OK")
</pallas_src>

<mosaic_0001>
module attributes {stable_mosaic.version = 11 : i64} {
  func.func @_backbone_pair_kernel(%arg0: i32, %arg1: i32, %arg2: memref<1x40x32xf32, #tpu.memory_space<vmem>>, %arg3: memref<1x160x128xbf16, #tpu.memory_space<vmem>>, %arg4: memref<1x1x128xf32, #tpu.memory_space<vmem>>, %arg5: memref<1x32x96xbf16, #tpu.memory_space<vmem>>, %arg6: memref<1x1x96xf32, #tpu.memory_space<vmem>>, %arg7: memref<1x32x32xbf16, #tpu.memory_space<vmem>>, %arg8: memref<1x1x32xf32, #tpu.memory_space<vmem>>, %arg9: memref<1x32x32xbf16, #tpu.memory_space<vmem>>, %arg10: memref<1x1x32xf32, #tpu.memory_space<vmem>>, %arg11: memref<1x32x32xbf16, #tpu.memory_space<vmem>>, %arg12: memref<1x1x32xf32, #tpu.memory_space<vmem>>, %arg13: memref<1x8x128xf32, #tpu.memory_space<vmem>>) attributes {dimension_semantics = [#tpu.dimension_semantics<parallel>, #tpu.dimension_semantics<parallel>], iteration_bounds = array<i64: 2, 1>, scalar_prefetch = 0 : i64, scratch_operands = 0 : i64, tpu.core_type = #tpu.core_type<tc>, window_params = [{transform_indices = @transform_0, window_bounds = array<i64: 1, 40, 32>}, {transform_indices = @transform_1, window_bounds = array<i64: 1, 160, 128>}, {transform_indices = @transform_2, window_bounds = array<i64: 1, 1, 128>}, {transform_indices = @transform_3, window_bounds = array<i64: 1, 32, 96>}, {transform_indices = @transform_4, window_bounds = array<i64: 1, 1, 96>}, {transform_indices = @transform_5, window_bounds = array<i64: 1, 32, 32>}, {transform_indices = @transform_6, window_bounds = array<i64: 1, 1, 32>}, {transform_indices = @transform_7, window_bounds = array<i64: 1, 32, 32>}, {transform_indices = @transform_8, window_bounds = array<i64: 1, 1, 32>}, {transform_indices = @transform_9, window_bounds = array<i64: 1, 32, 32>}, {transform_indices = @transform_10, window_bounds = array<i64: 1, 1, 32>}, {transform_indices = @transform_11, window_bounds = array<i64: 1, 8, 128>}]} {
    %c0 = arith.constant 0 : index
    %c0_0 = arith.constant 0 : index
    %c0_1 = arith.constant 0 : index
    %0 = vector.load %arg2[%c0, %c0_0, %c0_1] : memref<1x40x32xf32, #tpu.memory_space<vmem>>, vector<1x40x32xf32>
    %1 = vector.shape_cast %0 : vector<1x40x32xf32> to vector<40x32xf32>
    %2 = arith.truncf %1 : vector<40x32xf32> to vector<40x32xbf16>
    %c0_2 = arith.constant 0 : index
    %c0_3 = arith.constant 0 : index
    %c0_4 = arith.constant 0 : index
    %3 = vector.load %arg5[%c0_2, %c0_3, %c0_4] : memref<1x32x96xbf16, #tpu.memory_space<vmem>>, vector<1x32x96xbf16>
    %4 = vector.shape_cast %3 : vector<1x32x96xbf16> to vector<32x96xbf16>
    %cst = arith.constant dense<0.000000e+00> : vector<40x96xf32>
    %5 = tpu.matmul %2, %4, %cst {dimension_numbers = #tpu.dot_dimension_numbers<[1], [0], [0], [1], [0, 0, 1, 1], [], []>} : vector<40x32xbf16>, vector<32x96xbf16>, vector<40x96xf32> -> vector<40x96xf32>
    %c0_5 = arith.constant 0 : index
    %c0_6 = arith.constant 0 : index
    %c0_7 = arith.constant 0 : index
    %6 = vector.load %arg6[%c0_5, %c0_6, %c0_7] : memref<1x1x96xf32, #tpu.memory_space<vmem>>, vector<1x1x96xf32>
    %7 = vector.shape_cast %6 : vector<1x1x96xf32> to vector<1x96xf32>
    %8 = vector.broadcast %7 : vector<1x96xf32> to vector<40x96xf32>
    %9 = arith.addf %5, %8 : vector<40x96xf32>
    %10 = arith.truncf %9 : vector<40x96xf32> to vector<40x96xbf16>
    %11 = vector.shape_cast %10 : vector<40x96xbf16> to vector<8x5x96xbf16>
    %12 = vector.extract_strided_slice %11 {offsets = [0, 0, 0], sizes = [8, 5, 16], strides = [1, 1, 1]} : vector<8x5x96xbf16> to vector<8x5x16xbf16>
    %13 = vector.extract_strided_slice %11 {offsets = [0, 0, 32], sizes = [8, 5, 16], strides = [1, 1, 1]} : vector<8x5x96xbf16> to vector<8x5x16xbf16>
    %14 = vector.extract_strided_slice %11 {offsets = [0, 0, 64], sizes = [8, 5, 16], strides = [1, 1, 1]} : vector<8x5x96xbf16> to vector<8x5x16xbf16>
    "tpu.trace_start"() <{level = 10 : i32, message = "bqd,bkd->bqk"}> : () -> ()
    %cst_8 = arith.constant dense<0.000000e+00> : vector<8x5x5xf32>
    %15 = tpu.matmul %12, %13, %cst_8 {dimension_numbers = #tpu.dot_dimension_numbers<[2], [2], [1], [1], [0, 0, 0, 1, 1, 1], [0], [0]>} : vector<8x5x16xbf16>, vector<8x5x16xbf16>, vector<8x5x5xf32> -> vector<8x5x5xf32>
    "tpu.trace_stop"() : () -> ()
    %cst_9 = arith.constant 2.500000e-01 : f32
    %16 = vector.broadcast %cst_9 : f32 to vector<8x5x5xf32>
    %17 = arith.mulf %15, %16 : vector<8x5x5xf32>
    %cst_10 = arith.constant dense<0xFF800000> : vector<8x5xf32>
    %18 = vector.multi_reduction <maximumf>, %17, %cst_10 [2] : vector<8x5x5xf32> to vector<8x5xf32>
    %19 = vector.shape_cast %18 : vector<8x5xf32> to vector<8x5x1xf32>
    %20 = vector.broadcast %19 : vector<8x5x1xf32> to vector<8x5x5xf32>
    %21 = arith.subf %17, %20 : vector<8x5x5xf32>
    %22 = math.exp %21 : vector<8x5x5xf32>
    %cst_11 = arith.constant dense<0.000000e+00> : vector<8x5xf32>
    %23 = vector.multi_reduction <add>, %22, %cst_11 [2] : vector<8x5x5xf32> to vector<8x5xf32>
    %24 = vector.shape_cast %23 : vector<8x5xf32> to vector<8x5x1xf32>
    %25 = tpu.reciprocal %24 {approx = true} : vector<8x5x1xf32> -> vector<8x5x1xf32>
    %26 = vector.broadcast %25 : vector<8x5x1xf32> to vector<8x5x5xf32>
    %27 = arith.mulf %22, %26 : vector<8x5x5xf32>
    %28 = arith.truncf %27 : vector<8x5x5xf32> to vector<8x5x5xbf16>
    "tpu.trace_start"() <{level = 10 : i32, message = "bqk,bkd->bqd"}> : () -> ()
    %cst_12 = arith.constant dense<0.000000e+00> : vector<8x5x16xf32>
    %29 = tpu.matmul %28, %14, %cst_12 {dimension_numbers = #tpu.dot_dimension_numbers<[2], [1], [1], [2], [0, 0, 0, 1, 1, 2], [0], [0]>} : vector<8x5x5xbf16>, vector<8x5x16xbf16>, vector<8x5x16xf32> -> vector<8x5x16xf32>
    "tpu.trace_stop"() : () -> ()
    %30 = vector.extract_strided_slice %11 {offsets = [0, 0, 16], sizes = [8, 5, 16], strides = [1, 1, 1]} : vector<8x5x96xbf16> to vector<8x5x16xbf16>
    %31 = vector.extract_strided_slice %11 {offsets = [0, 0, 48], sizes = [8, 5, 16], strides = [1, 1, 1]} : vector<8x5x96xbf16> to vector<8x5x16xbf16>
    %32 = vector.extract_strided_slice %11 {offsets = [0, 0, 80], sizes = [8, 5, 16], strides = [1, 1, 1]} : vector<8x5x96xbf16> to vector<8x5x16xbf16>
    "tpu.trace_start"() <{level = 10 : i32, message = "bqd,bkd->bqk"}> : () -> ()
    %cst_13 = arith.constant dense<0.000000e+00> : vector<8x5x5xf32>
    %33 = tpu.matmul %30, %31, %cst_13 {dimension_numbers = #tpu.dot_dimension_numbers<[2], [2], [1], [1], [0, 0, 0, 1, 1, 1], [0], [0]>} : vector<8x5x16xbf16>, vector<8x5x16xbf16>, vector<8x5x5xf32> -> vector<8x5x5xf32>
    "tpu.trace_stop"() : () -> ()
    %cst_14 = arith.constant 2.500000e-01 : f32
    %34 = vector.broadcast %cst_14 : f32 to vector<8x5x5xf32>
    %35 = arith.mulf %33, %34 : vector<8x5x5xf32>
    %cst_15 = arith.constant dense<0xFF800000> : vector<8x5xf32>
    %36 = vector.multi_reduction <maximumf>, %35, %cst_15 [2] : vector<8x5x5xf32> to vector<8x5xf32>
    %37 = vector.shape_cast %36 : vector<8x5xf32> to vector<8x5x1xf32>
    %38 = vector.broadcast %37 : vector<8x5x1xf32> to vector<8x5x5xf32>
    %39 = arith.subf %35, %38 : vector<8x5x5xf32>
    %40 = math.exp %39 : vector<8x5x5xf32>
    %cst_16 = arith.constant dense<0.000000e+00> : vector<8x5xf32>
    %41 = vector.multi_reduction <add>, %40, %cst_16 [2] : vector<8x5x5xf32> to vector<8x5xf32>
    %42 = vector.shape_cast %41 : vector<8x5xf32> to vector<8x5x1xf32>
    %43 = tpu.reciprocal %42 {approx = true} : vector<8x5x1xf32> -> vector<8x5x1xf32>
    %44 = vector.broadcast %43 : vector<8x5x1xf32> to vector<8x5x5xf32>
    %45 = arith.mulf %40, %44 : vector<8x5x5xf32>
    %46 = arith.truncf %45 : vector<8x5x5xf32> to vector<8x5x5xbf16>
    "tpu.trace_start"() <{level = 10 : i32, message = "bqk,bkd->bqd"}> : () -> ()
    %cst_17 = arith.constant dense<0.000000e+00> : vector<8x5x16xf32>
    %47 = tpu.matmul %46, %32, %cst_17 {dimension_numbers = #tpu.dot_dimension_numbers<[2], [1], [1], [2], [0, 0, 0, 1, 1, 2], [0], [0]>} : vector<8x5x5xbf16>, vector<8x5x16xbf16>, vector<8x5x16xf32> -> vector<8x5x16xf32>
    "tpu.trace_stop"() : () -> ()
    %48 = tpu.concatenate %29, %47 in 2 : vector<8x5x16xf32>, vector<8x5x16xf32> -> vector<8x5x32xf32>
    %49 = vector.shape_cast %48 : vector<8x5x32xf32> to vector<40x32xf32>
    %50 = arith.truncf %49 : vector<40x32xf32> to vector<40x32xbf16>
    %c0_18 = arith.constant 0 : index
    %c0_19 = arith.constant 0 : index
    %c0_20 = arith.constant 0 : index
    %51 = vector.load %arg7[%c0_18, %c0_19, %c0_20] : memref<1x32x32xbf16, #tpu.memory_space<vmem>>, vector<1x32x32xbf16>
    %52 = vector.shape_cast %51 : vector<1x32x32xbf16> to vector<32x32xbf16>
    %cst_21 = arith.constant dense<0.000000e+00> : vector<40x32xf32>
    %53 = tpu.matmul %50, %52, %cst_21 {dimension_numbers = #tpu.dot_dimension_numbers<[1], [0], [0], [1], [0, 0, 1, 1], [], []>} : vector<40x32xbf16>, vector<32x32xbf16>, vector<40x32xf32> -> vector<40x32xf32>
    %c0_22 = arith.constant 0 : index
    %c0_23 = arith.constant 0 : index
    %c0_24 = arith.constant 0 : index
    %54 = vector.load %arg8[%c0_22, %c0_23, %c0_24] : memref<1x1x32xf32, #tpu.memory_space<vmem>>, vector<1x1x32xf32>
    %55 = vector.shape_cast %54 : vector<1x1x32xf32> to vector<1x32xf32>
    %56 = vector.broadcast %55 : vector<1x32xf32> to vector<40x32xf32>
    %57 = arith.addf %53, %56 : vector<40x32xf32>
    %58 = arith.addf %1, %57 : vector<40x32xf32>
    %cst_25 = arith.constant 0.999994993 : f32
    %59 = vector.broadcast %cst_25 : f32 to vector<40x32xf32>
    %60 = arith.mulf %58, %59 : vector<40x32xf32>
    %61 = arith.truncf %60 : vector<40x32xf32> to vector<40x32xbf16>
    %c0_26 = arith.constant 0 : index
    %c0_27 = arith.constant 0 : index
    %c0_28 = arith.constant 0 : index
    %62 = vector.load %arg9[%c0_26, %c0_27, %c0_28] : memref<1x32x32xbf16, #tpu.memory_space<vmem>>, vector<1x32x32xbf16>
    %63 = vector.shape_cast %62 : vector<1x32x32xbf16> to vector<32x32xbf16>
    %cst_29 = arith.constant dense<0.000000e+00> : vector<40x32xf32>
    %64 = tpu.matmul %61, %63, %cst_29 {dimension_numbers = #tpu.dot_dimension_numbers<[1], [0], [0], [1], [0, 0, 1, 1], [], []>} : vector<40x32xbf16>, vector<32x32xbf16>, vector<40x32xf32> -> vector<40x32xf32>
    %c0_30 = arith.constant 0 : index
    %c0_31 = arith.constant 0 : index
    %c0_32 = arith.constant 0 : index
    %65 = vector.load %arg10[%c0_30, %c0_31, %c0_32] : memref<1x1x32xf32, #tpu.memory_space<vmem>>, vector<1x1x32xf32>
    %66 = vector.shape_cast %65 : vector<1x1x32xf32> to vector<1x32xf32>
    %67 = vector.broadcast %66 : vector<1x32xf32> to vector<40x32xf32>
    %68 = arith.addf %64, %67 : vector<40x32xf32>
    %cst_33 = arith.constant 5.000000e-01 : f32
    %69 = vector.broadcast %cst_33 : f32 to vector<40x32xf32>
    %70 = arith.mulf %69, %68 : vector<40x32xf32>
    %cst_34 = arith.constant 4.471500e-02 : f32
    %71 = vector.broadcast %cst_34 : f32 to vector<40x32xf32>
    %72 = arith.mulf %71, %68 : vector<40x32xf32>
    %73 = arith.mulf %72, %68 : vector<40x32xf32>
    %74 = arith.mulf %73, %68 : vector<40x32xf32>
    %75 = arith.addf %68, %74 : vector<40x32xf32>
    %cst_35 = arith.constant 0.797884583 : f32
    %76 = vector.broadcast %cst_35 : f32 to vector<40x32xf32>
    %77 = arith.mulf %76, %75 : vector<40x32xf32>
    %78 = math.tanh %77 : vector<40x32xf32>
    %cst_36 = arith.constant 1.000000e+00 : f32
    %79 = vector.broadcast %cst_36 : f32 to vector<40x32xf32>
    %80 = arith.addf %79, %78 : vector<40x32xf32>
    %81 = arith.mulf %70, %80 : vector<40x32xf32>
    %82 = arith.truncf %81 : vector<40x32xf32> to vector<40x32xbf16>
    %c0_37 = arith.constant 0 : index
    %c0_38 = arith.constant 0 : index
    %c0_39 = arith.constant 0 : index
    %83 = vector.load %arg11[%c0_37, %c0_38, %c0_39] : memref<1x32x32xbf16, #tpu.memory_space<vmem>>, vector<1x32x32xbf16>
    %84 = vector.shape_cast %83 : vector<1x32x32xbf16> to vector<32x32xbf16>
    %cst_40 = arith.constant dense<0.000000e+00> : vector<40x32xf32>
    %85 = tpu.matmul %82, %84, %cst_40 {dimension_numbers = #tpu.dot_dimension_numbers<[1], [0], [0], [1], [0, 0, 1, 1], [], []>} : vector<40x32xbf16>, vector<32x32xbf16>, vector<40x32xf32> -> vector<40x32xf32>
    %c0_41 = arith.constant 0 : index
    %c0_42 = arith.constant 0 : index
    %c0_43 = arith.constant 0 : index
    %86 = vector.load %arg12[%c0_41, %c0_42, %c0_43] : memref<1x1x32xf32, #tpu.memory_space<vmem>>, vector<1x1x32xf32>
    %87 = vector.shape_cast %86 : vector<1x1x32xf32> to vector<1x32xf32>
    %88 = vector.broadcast %87 : vector<1x32xf32> to vector<40x32xf32>
    %89 = arith.addf %85, %88 : vector<40x32xf32>
    %90 = arith.addf %60, %89 : vector<40x32xf32>
    %cst_44 = arith.constant 0.999994993 : f32
    %91 = vector.broadcast %cst_44 : f32 to vector<40x32xf32>
    %92 = arith.mulf %90, %91 : vector<40x32xf32>
    %93 = arith.truncf %92 : vector<40x32xf32> to vector<40x32xbf16>
    %94 = vector.shape_cast %93 : vector<40x32xbf16> to vector<8x5x32xbf16>
    %95 = vector.extract_strided_slice %94 {offsets = [0, 0, 0], sizes = [8, 1, 32], strides = [1, 1, 1]} : vector<8x5x32xbf16> to vector<8x1x32xbf16>
    %96 = vector.shape_cast %95 : vector<8x1x32xbf16> to vector<8x32xbf16>
    %97 = vector.extract_strided_slice %94 {offsets = [0, 1, 0], sizes = [8, 1, 32], strides = [1, 1, 1]} : vector<8x5x32xbf16> to vector<8x1x32xbf16>
    %98 = vector.shape_cast %97 : vector<8x1x32xbf16> to vector<8x32xbf16>
    %99 = vector.extract_strided_slice %94 {offsets = [0, 2, 0], sizes = [8, 1, 32], strides = [1, 1, 1]} : vector<8x5x32xbf16> to vector<8x1x32xbf16>
    %100 = vector.shape_cast %99 : vector<8x1x32xbf16> to vector<8x32xbf16>
    %101 = vector.extract_strided_slice %94 {offsets = [0, 3, 0], sizes = [8, 1, 32], strides = [1, 1, 1]} : vector<8x5x32xbf16> to vector<8x1x32xbf16>
    %102 = vector.shape_cast %101 : vector<8x1x32xbf16> to vector<8x32xbf16>
    %103 = vector.extract_strided_slice %94 {offsets = [0, 4, 0], sizes = [8, 1, 32], strides = [1, 1, 1]} : vector<8x5x32xbf16> to vector<8x1x32xbf16>
    %104 = vector.shape_cast %103 : vector<8x1x32xbf16> to vector<8x32xbf16>
    %105 = tpu.concatenate %96, %98, %100, %102, %104 in 1 : vector<8x32xbf16>, vector<8x32xbf16>, vector<8x32xbf16>, vector<8x32xbf16>, vector<8x32xbf16> -> vector<8x160xbf16>
    %c0_45 = arith.constant 0 : index
    %c0_46 = arith.constant 0 : index
    %c0_47 = arith.constant 0 : index
    %106 = vector.load %arg3[%c0_45, %c0_46, %c0_47] : memref<1x160x128xbf16, #tpu.memory_space<vmem>>, vector<1x160x128xbf16>
    %107 = vector.shape_cast %106 : vector<1x160x128xbf16> to vector<160x128xbf16>
    %cst_48 = arith.constant dense<0.000000e+00> : vector<8x128xf32>
    %108 = tpu.matmul %105, %107, %cst_48 {dimension_numbers = #tpu.dot_dimension_numbers<[1], [0], [0], [1], [0, 0, 1, 1], [], []>} : vector<8x160xbf16>, vector<160x128xbf16>, vector<8x128xf32> -> vector<8x128xf32>
    %c0_49 = arith.constant 0 : index
    %c0_50 = arith.constant 0 : index
    %c0_51 = arith.constant 0 : index
    %109 = vector.load %arg4[%c0_49, %c0_50, %c0_51] : memref<1x1x128xf32, #tpu.memory_space<vmem>>, vector<1x1x128xf32>
    %110 = vector.shape_cast %109 : vector<1x1x128xf32> to vector<1x128xf32>
    %111 = vector.broadcast %110 : vector<1x128xf32> to vector<8x128xf32>
    %112 = arith.addf %108, %111 : vector<8x128xf32>
    %c0_52 = arith.constant 0 : index
    %c0_53 = arith.constant 0 : index
    %c0_54 = arith.constant 0 : index
    %113 = vector.load %arg13[%c0_52, %c0_53, %c0_54] : memref<1x8x128xf32, #tpu.memory_space<vmem>>, vector<1x8x128xf32>
    %114 = vector.shape_cast %113 : vector<1x8x128xf32> to vector<8x128xf32>
    %115 = vector.shape_cast %112 : vector<8x128xf32> to vector<1x8x128xf32>
    tpu.vector_store %arg13[%c0_52, %c0_53, %c0_54], %115 {strides = array<i32>} : memref<1x8x128xf32, #tpu.memory_space<vmem>>, vector<1x8x128xf32>,
    return
  }
  func.func @transform_0(%arg0: i32, %arg1: i32) -> (i32, i32, i32) {
    %c0_i32 = arith.constant 0 : i32
    %c0_i32_0 = arith.constant 0 : i32
    return %arg0, %arg1, %c0_i32 : i32, i32, i32
  }
  func.func @transform_1(%arg0: i32, %arg1: i32) -> (i32, i32, i32) {
    %c0_i32 = arith.constant 0 : i32
    %c0_i32_0 = arith.constant 0 : i32
    %c0_i32_1 = arith.constant 0 : i32
    return %arg0, %c0_i32, %c0_i32_0 : i32, i32, i32
  }
  func.func @transform_2(%arg0: i32, %arg1: i32) -> (i32, i32, i32) {
    %c0_i32 = arith.constant 0 : i32
    %c0_i32_0 = arith.constant 0 : i32
    %c0_i32_1 = arith.constant 0 : i32
    return %arg0, %c0_i32, %c0_i32_0 : i32, i32, i32
  }
  func.func @transform_3(%arg0: i32, %arg1: i32) -> (i32, i32, i32) {
    %c0_i32 = arith.constant 0 : i32
    %c0_i32_0 = arith.constant 0 : i32
    %c0_i32_1 = arith.constant 0 : i32
    return %arg0, %c0_i32, %c0_i32_0 : i32, i32, i32
  }
  func.func @transform_4(%arg0: i32, %arg1: i32) -> (i32, i32, i32) {
    %c0_i32 = arith.constant 0 : i32
    %c0_i32_0 = arith.constant 0 : i32
    %c0_i32_1 = arith.constant 0 : i32
    return %arg0, %c0_i32, %c0_i32_0 : i32, i32, i32
  }
  func.func @transform_5(%arg0: i32, %arg1: i32) -> (i32, i32, i32) {
    %c0_i32 = arith.constant 0 : i32
    %c0_i32_0 = arith.constant 0 : i32
    %c0_i32_1 = arith.constant 0 : i32
    return %arg0, %c0_i32, %c0_i32_0 : i32, i32, i32
  }
  func.func @transform_6(%arg0: i32, %arg1: i32) -> (i32, i32, i32) {
    %c0_i32 = arith.constant 0 : i32
    %c0_i32_0 = arith.constant 0 : i32
    %c0_i32_1 = arith.constant 0 : i32
    return %arg0, %c0_i32, %c0_i32_0 : i32, i32, i32
  }
  func.func @transform_7(%arg0: i32, %arg1: i32) -> (i32, i32, i32) {
    %c0_i32 = arith.constant 0 : i32
    %c0_i32_0 = arith.constant 0 : i32
    %c0_i32_1 = arith.constant 0 : i32
    return %arg0, %c0_i32, %c0_i32_0 : i32, i32, i32
  }
  func.func @transform_8(%arg0: i32, %arg1: i32) -> (i32, i32, i32) {
    %c0_i32 = arith.constant 0 : i32
    %c0_i32_0 = arith.constant 0 : i32
    %c0_i32_1 = arith.constant 0 : i32
    return %arg0, %c0_i32, %c0_i32_0 : i32, i32, i32
  }
  func.func @transform_9(%arg0: i32, %arg1: i32) -> (i32, i32, i32) {
    %c0_i32 = arith.constant 0 : i32
    %c0_i32_0 = arith.constant 0 : i32
    %c0_i32_1 = arith.constant 0 : i32
    return %arg0, %c0_i32, %c0_i32_0 : i32, i32, i32
  }
  func.func @transform_10(%arg0: i32, %arg1: i32) -> (i32, i32, i32) {
    %c0_i32 = arith.constant 0 : i32
    %c0_i32_0 = arith.constant 0 : i32
    %c0_i32_1 = arith.constant 0 : i32
    return %arg0, %c0_i32, %c0_i32_0 : i32, i32, i32
  }
  func.func @transform_11(%arg0: i32, %arg1: i32) -> (i32, i32, i32) {
    %c0_i32 = arith.constant 0 : i32
    %c0_i32_0 = arith.constant 0 : i32
    return %arg0, %arg1, %c0_i32 : i32, i32, i32
  }
}

</mosaic_0001>

<llo_original>
// kernel: model_forward.1
$region0: #{model_forward.1}
  #allocation0 [shape = 'u32[]', space=smem, size = 0x4, offset = 0x4, fixed_abs, tag = 'smem constant byte address 0x4 - core index']
  #allocation1 [shape = 'u32[72,128]{1,0:T(1,128)}', space=vmem, size = 0x9000, scoped, tag = 'internal scratch']
  %s0 = inlined_call_operand.vmem [shape: f32[2,40,32], index: 0, kind: input, shape index: {}]
  %s1 = inlined_call_operand.vmem [shape: bf16[2,160,128], index: 1, kind: input, shape index: {}]
  %s2 = inlined_call_operand.vmem [shape: f32[2,1,128], index: 2, kind: input, shape index: {}]
  %s3 = inlined_call_operand.vmem [shape: bf16[2,32,96], index: 3, kind: input, shape index: {}]
  %s4 = inlined_call_operand.vmem [shape: f32[2,1,96], index: 4, kind: input, shape index: {}]
  %s5 = inlined_call_operand.vmem [shape: bf16[2,32,32], index: 5, kind: input, shape index: {}]
  %s6 = inlined_call_operand.vmem [shape: f32[2,1,32], index: 6, kind: input, shape index: {}]
  %s7 = inlined_call_operand.vmem [shape: bf16[2,32,32], index: 7, kind: input, shape index: {}]
  %s8 = inlined_call_operand.vmem [shape: f32[2,1,32], index: 8, kind: input, shape index: {}]
  %s9 = inlined_call_operand.vmem [shape: bf16[2,32,32], index: 9, kind: input, shape index: {}]
  %s10 = inlined_call_operand.vmem [shape: f32[2,1,32], index: 10, kind: input, shape index: {}]
  %s11 = inlined_call_operand.vmem [shape: f32[2,8,128], index: 11, kind: output, shape index: {}]
  %s12 = sld [smem:[#allocation0]]
  $region77: #{model_forward.1} parent=0
    _
  %s14 = ssub.s32 1, %s12
  %s15 = scalar_select 0, %s14, %s12
  loop: start=0, step=1, limit=4
  $region2: #{model_forward.1} parent=0 // loop_pre_header
    _
  $region3: #{model_forward.1} parent=0 // loop_header
    %s17 = sphi 0, %s21
    %p18 = scmp.ge.s32.totalorder %s17, 4
    %s24 = sphi 0, %s36
    %s25 = sphi 0, %s32
    %s26 = sphi 0, %s24
    %s27 = sphi 0, %s25
    %s28 = sphi 0, %s26
    %s29 = sphi 0, %s27
    %s41 = sphi 0, %s43
    %s44 = sphi 0, %s41
    %s45 = sphi 0, %s44
    %s61 = sphi 0, %s45
    %s67 = sphi 0, %s69
    %s70 = sphi 0, %s67
    %s71 = sphi 0, %s70
    %s87 = sphi 0, %s71
    %s93 = sphi 0, %s95
    %s96 = sphi 0, %s93
    %s97 = sphi 0, %s96
    %s113 = sphi 0, %s97
    %s119 = sphi 0, %s121
    %s122 = sphi 0, %s119
    %s123 = sphi 0, %s122
    %s139 = sphi 0, %s123
    %s145 = sphi 0, %s147
    %s148 = sphi 0, %s145
    %s149 = sphi 0, %s148
    %s165 = sphi 0, %s149
    %s171 = sphi 0, %s173
    %s174 = sphi 0, %s171
    %s175 = sphi 0, %s174
    %s191 = sphi 0, %s175
    %s197 = sphi 0, %s199
    %s200 = sphi 0, %s197
    %s201 = sphi 0, %s200
    %s217 = sphi 0, %s201
    %s223 = sphi 0, %s225
    %s226 = sphi 0, %s223
    %s227 = sphi 0, %s226
    %s243 = sphi 0, %s227
    %s249 = sphi 0, %s251
    %s252 = sphi 0, %s249
    %s253 = sphi 0, %s252
    %s269 = sphi 0, %s253
    %s275 = sphi 0, %s277
    %s278 = sphi 0, %s275
    %s279 = sphi 0, %s278
    %s295 = sphi 0, %s279
    %s301 = sphi 0, %s303
    %s304 = sphi 0, %s301
    %s305 = sphi 0, %s304
    %s321 = sphi 0, %s305
    %s329 = sphi 0, %s331
    %s332 = sphi 0, %s329
    %s333 = sphi 0, %s332
    %s349 = sphi 0, %s333
  $region4: #{model_forward.1} parent=0 // loop_header_branch
    %20 = sbr.rel (%p18) target = $region8
  $region5: #{model_forward.1} parent=0 // loop_body
    %s22 = ssub.s32 %s17, 1
    %s23 = ssub.s32 %s17, 2
    %s30 = sadd.s32 1, %s25
    %p31 = scmp.ge.s32.totalorder %s30, 1
    %s32 = scalar_select %p31, 0, %s30
    %s33 = sadd.s32 1, %s24
    %s34 = scalar_select %p31, %s33, %s24
    %p35 = scmp.ge.s32.totalorder %s34, 2
    %s36 = scalar_select %p35, 0, %s34
    %s37 = ssub.s32 %s24, %s36
    %s38 = ssub.s32 %s25, %s32
    %s39 = sor.u32 %s37, %s38
    %p40 = scmp.eq.s32.totalorder %s39, 0
    %s42 = sadd.s32 %s41, 1
    %s43 = scalar_select %p40, %s41, %s42
    %p46 = pneg %p40
    %p47 = scmp.eq.s32.totalorder %s17, 1
    %p48 = por %p46, %p47
    %p49 = scmp.ne.s32.totalorder %s41, %s44
    %p50 = scmp.eq.s32.totalorder %s17, 0
    %p51 = por %p49, %p50
    %p52 = scmp.ne.s32.totalorder %s41, %s44
    %p53 = scmp.eq.s32.totalorder %s22, 1
    %p54 = por %p52, %p53
    %p55 = scmp.ne.s32.totalorder %s44, %s45
    %p56 = scmp.eq.s32.totalorder %s22, 0
    %p57 = por %p55, %p56
    %p58 = scmp.ne.s32.totalorder %s44, %s45
    %p59 = scmp.eq.s32.totalorder %s23, 1
    %p60 = por %p58, %p59
    %p62 = scmp.ne.s32.totalorder %s45, %s61
    %p63 = scmp.eq.s32.totalorder %s23, 0
    %p64 = por %p62, %p63
    %s65 = ssub.s32 %s24, %s36
    %p66 = scmp.eq.s32.totalorder %s65, 0
    %s68 = sadd.s32 %s67, 1
    %s69 = scalar_select %p66, %s67, %s68
    %p72 = pneg %p66
    %p73 = scmp.eq.s32.totalorder %s17, 1
    %p74 = por %p72, %p73
    %p75 = scmp.ne.s32.totalorder %s67, %s70
    %p76 = scmp.eq.s32.totalorder %s17, 0
    %p77 = por %p75, %p76
    %p78 = scmp.ne.s32.totalorder %s67, %s70
    %p79 = scmp.eq.s32.totalorder %s22, 1
    %p80 = por %p78, %p79
    %p81 = scmp.ne.s32.totalorder %s70, %s71
    %p82 = scmp.eq.s32.totalorder %s22, 0
    %p83 = por %p81, %p82
    %p84 = scmp.ne.s32.totalorder %s70, %s71
    %p85 = scmp.eq.s32.totalorder %s23, 1
    %p86 = por %p84, %p85
    %p88 = scmp.ne.s32.totalorder %s71, %s87
    %p89 = scmp.eq.s32.totalorder %s23, 0
    %p90 = por %p88, %p89
    %s91 = ssub.s32 %s24, %s36
    %p92 = scmp.eq.s32.totalorder %s91, 0
    %s94 = sadd.s32 %s93, 1
    %s95 = scalar_select %p92, %s93, %s94
    %p98 = pneg %p92
    %p99 = scmp.eq.s32.totalorder %s17, 1
    %p100 = por %p98, %p99
    %p101 = scmp.ne.s32.totalorder %s93, %s96
    %p102 = scmp.eq.s32.totalorder %s17, 0
    %p103 = por %p101, %p102
    %p104 = scmp.ne.s32.totalorder %s93, %s96
    %p105 = scmp.eq.s32.totalorder %s22, 1
    %p106 = por %p104, %p105
    %p107 = scmp.ne.s32.totalorder %s96, %s97
    %p108 = scmp.eq.s32.totalorder %s22, 0
    %p109 = por %p107, %p108
    %p110 = scmp.ne.s32.totalorder %s96, %s97
    %p111 = scmp.eq.s32.totalorder %s23, 1
    %p112 = por %p110, %p111
    %p114 = scmp.ne.s32.totalorder %s97, %s113
    %p115 = scmp.eq.s32.totalorder %s23, 0
    %p116 = por %p114, %p115
    %s117 = ssub.s32 %s24, %s36
    %p118 = scmp.eq.s32.totalorder %s117, 0
    %s120 = sadd.s32 %s119, 1
    %s121 = scalar_select %p118, %s119, %s120
    %p124 = pneg %p118
    %p125 = scmp.eq.s32.totalorder %s17, 1
    %p126 = por %p124, %p125
    %p127 = scmp.ne.s32.totalorder %s119, %s122
    %p128 = scmp.eq.s32.totalorder %s17, 0
    %p129 = por %p127, %p128
    %p130 = scmp.ne.s32.totalorder %s119, %s122
    %p131 = scmp.eq.s32.totalorder %s22, 1
    %p132 = por %p130, %p131
    %p133 = scmp.ne.s32.totalorder %s122, %s123
    %p134 = scmp.eq.s32.totalorder %s22, 0
    %p135 = por %p133, %p134
    %p136 = scmp.ne.s32.totalorder %s122, %s123
    %p137 = scmp.eq.s32.totalorder %s23, 1
    %p138 = por %p136, %p137
    %p140 = scmp.ne.s32.totalorder %s123, %s139
    %p141 = scmp.eq.s32.totalorder %s23, 0
    %p142 = por %p140, %p141
    %s143 = ssub.s32 %s24, %s36
    %p144 = scmp.eq.s32.totalorder %s143, 0
    %s146 = sadd.s32 %s145, 1
    %s147 = scalar_select %p144, %s145, %s146
    %p150 = pneg %p144
    %p151 = scmp.eq.s32.totalorder %s17, 1
    %p152 = por %p150, %p151
    %p153 = scmp.ne.s32.totalorder %s145, %s148
    %p154 = scmp.eq.s32.totalorder %s17, 0
    %p155 = por %p153, %p154
    %p156 = scmp.ne.s32.totalorder %s145, %s148
    %p157 = scmp.eq.s32.totalorder %s22, 1
    %p158 = por %p156, %p157
    %p159 = scmp.ne.s32.totalorder %s148, %s149
    %p160 = scmp.eq.s32.totalorder %s22, 0
    %p161 = por %p159, %p160
    %p162 = scmp.ne.s32.totalorder %s148, %s149
    %p163 = scmp.eq.s32.totalorder %s23, 1
    %p164 = por %p162, %p163
    %p166 = scmp.ne.s32.totalorder %s149, %s165
    %p167 = scmp.eq.s32.totalorder %s23, 0
    %p168 = por %p166, %p167
    %s169 = ssub.s32 %s24, %s36
    %p170 = scmp.eq.s32.totalorder %s169, 0
    %s172 = sadd.s32 %s171, 1
    %s173 = scalar_select %p170, %s171, %s172
    %p176 = pneg %p170
    %p177 = scmp.eq.s32.totalorder %s17, 1
    %p178 = por %p176, %p177
    %p179 = scmp.ne.s32.totalorder %s171, %s174
    %p180 = scmp.eq.s32.totalorder %s17, 0
    %p181 = por %p179, %p180
    %p182 = scmp.ne.s32.totalorder %s171, %s174
    %p183 = scmp.eq.s32.totalorder %s22, 1
    %p184 = por %p182, %p183
    %p185 = scmp.ne.s32.totalorder %s174, %s175
    %p186 = scmp.eq.s32.totalorder %s22, 0
    %p187 = por %p185, %p186
    %p188 = scmp.ne.s32.totalorder %s174, %s175
    %p189 = scmp.eq.s32.totalorder %s23, 1
    %p190 = por %p188, %p189
    %p192 = scmp.ne.s32.totalorder %s175, %s191
    %p193 = scmp.eq.s32.totalorder %s23, 0
    %p194 = por %p192, %p193
    %s195 = ssub.s32 %s24, %s36
    %p196 = scmp.eq.s32.totalorder %s195, 0
    %s198 = sadd.s32 %s197, 1
    %s199 = scalar_select %p196, %s197, %s198
    %p202 = pneg %p196
    %p203 = scmp.eq.s32.totalorder %s17, 1
    %p204 = por %p202, %p203
    %p205 = scmp.ne.s32.totalorder %s197, %s200
    %p206 = scmp.eq.s32.totalorder %s17, 0
    %p207 = por %p205, %p206
    %p208 = scmp.ne.s32.totalorder %s197, %s200
    %p209 = scmp.eq.s32.totalorder %s22, 1
    %p210 = por %p208, %p209
    %p211 = scmp.ne.s32.totalorder %s200, %s201
    %p212 = scmp.eq.s32.totalorder %s22, 0
    %p213 = por %p211, %p212
    %p214 = scmp.ne.s32.totalorder %s200, %s201
    %p215 = scmp.eq.s32.totalorder %s23, 1
    %p216 = por %p214, %p215
    %p218 = scmp.ne.s32.totalorder %s201, %s217
    %p219 = scmp.eq.s32.totalorder %s23, 0
    %p220 = por %p218, %p219
    %s221 = ssub.s32 %s24, %s36
    %p222 = scmp.eq.s32.totalorder %s221, 0
    %s224 = sadd.s32 %s223, 1
    %s225 = scalar_select %p222, %s223, %s224
    %p228 = pneg %p222
    %p229 = scmp.eq.s32.totalorder %s17, 1
    %p230 = por %p228, %p229
    %p231 = scmp.ne.s32.totalorder %s223, %s226
    %p232 = scmp.eq.s32.totalorder %s17, 0
    %p233 = por %p231, %p232
    %p234 = scmp.ne.s32.totalorder %s223, %s226
    %p235 = scmp.eq.s32.totalorder %s22, 1
    %p236 = por %p234, %p235
    %p237 = scmp.ne.s32.totalorder %s226, %s227
    %p238 = scmp.eq.s32.totalorder %s22, 0
    %p239 = por %p237, %p238
    %p240 = scmp.ne.s32.totalorder %s226, %s227
    %p241 = scmp.eq.s32.totalorder %s23, 1
    %p242 = por %p240, %p241
    %p244 = scmp.ne.s32.totalorder %s227, %s243
    %p245 = scmp.eq.s32.totalorder %s23, 0
    %p246 = por %p244, %p245
    %s247 = ssub.s32 %s24, %s36
    %p248 = scmp.eq.s32.totalorder %s247, 0
    %s250 = sadd.s32 %s249, 1
    %s251 = scalar_select %p248, %s249, %s250
    %p254 = pneg %p248
    %p255 = scmp.eq.s32.totalorder %s17, 1
    %p256 = por %p254, %p255
    %p257 = scmp.ne.s32.totalorder %s249, %s252
    %p258 = scmp.eq.s32.totalorder %s17, 0
    %p259 = por %p257, %p258
    %p260 = scmp.ne.s32.totalorder %s249, %s252
    %p261 = scmp.eq.s32.totalorder %s22, 1
    %p262 = por %p260, %p261
    %p263 = scmp.ne.s32.totalorder %s252, %s253
    %p264 = scmp.eq.s32.totalorder %s22, 0
    %p265 = por %p263, %p264
    %p266 = scmp.ne.s32.totalorder %s252, %s253
    %p267 = scmp.eq.s32.totalorder %s23, 1
    %p268 = por %p266, %p267
    %p270 = scmp.ne.s32.totalorder %s253, %s269
    %p271 = scmp.eq.s32.totalorder %s23, 0
    %p272 = por %p270, %p271
    %s273 = ssub.s32 %s24, %s36
    %p274 = scmp.eq.s32.totalorder %s273, 0
    %s276 = sadd.s32 %s275, 1
    %s277 = scalar_select %p274, %s275, %s276
    %p280 = pneg %p274
    %p281 = scmp.eq.s32.totalorder %s17, 1
    %p282 = por %p280, %p281
    %p283 = scmp.ne.s32.totalorder %s275, %s278
    %p284 = scmp.eq.s32.totalorder %s17, 0
    %p285 = por %p283, %p284
    %p286 = scmp.ne.s32.totalorder %s275, %s278
    %p287 = scmp.eq.s32.totalorder %s22, 1
    %p288 = por %p286, %p287
    %p289 = scmp.ne.s32.totalorder %s278, %s279
    %p290 = scmp.eq.s32.totalorder %s22, 0
    %p291 = por %p289, %p290
    %p292 = scmp.ne.s32.totalorder %s278, %s279
    %p293 = scmp.eq.s32.totalorder %s23, 1
    %p294 = por %p292, %p293
    %p296 = scmp.ne.s32.totalorder %s279, %s295
    %p297 = scmp.eq.s32.totalorder %s23, 0
    %p298 = por %p296, %p297
    %s299 = ssub.s32 %s24, %s36
    %p300 = scmp.eq.s32.totalorder %s299, 0
    %s302 = sadd.s32 %s301, 1
    %s303 = scalar_select %p300, %s301, %s302
    %p306 = pneg %p300
    %p307 = scmp.eq.s32.totalorder %s17, 1
    %p308 = por %p306, %p307
    %p309 = scmp.ne.s32.totalorder %s301, %s304
    %p310 = scmp.eq.s32.totalorder %s17, 0
    %p311 = por %p309, %p310
    %p312 = scmp.ne.s32.totalorder %s301, %s304
    %p313 = scmp.eq.s32.totalorder %s22, 1
    %p314 = por %p312, %p313
    %p315 = scmp.ne.s32.totalorder %s304, %s305
    %p316 = scmp.eq.s32.totalorder %s22, 0
    %p317 = por %p315, %p316
    %p318 = scmp.ne.s32.totalorder %s304, %s305
    %p319 = scmp.eq.s32.totalorder %s23, 1
    %p320 = por %p318, %p319
    %p322 = scmp.ne.s32.totalorder %s305, %s321
    %p323 = scmp.eq.s32.totalorder %s23, 0
    %p324 = por %p322, %p323
    %s325 = ssub.s32 %s24, %s36
    %s326 = ssub.s32 %s25, %s32
    %s327 = sor.u32 %s325, %s326
    %p328 = scmp.eq.s32.totalorder %s327, 0
    %s330 = sadd.s32 %s329, 1
    %s331 = scalar_select %p328, %s329, %s330
    %p334 = pneg %p328
    %p335 = scmp.eq.s32.totalorder %s17, 1
    %p336 = por %p334, %p335
    %p337 = scmp.ne.s32.totalorder %s329, %s332
    %p338 = scmp.eq.s32.totalorder %s17, 0
    %p339 = por %p337, %p338
    %p340 = scmp.ne.s32.totalorder %s329, %s332
    %p341 = scmp.eq.s32.totalorder %s22, 1
    %p342 = por %p340, %p341
    %p343 = scmp.ne.s32.totalorder %s332, %s333
    %p344 = scmp.eq.s32.totalorder %s22, 0
    %p345 = por %p343, %p344
    %p346 = scmp.ne.s32.totalorder %s332, %s333
    %p347 = scmp.eq.s32.totalorder %s23, 1
    %p348 = por %p346, %p347
    %p350 = scmp.ne.s32.totalorder %s333, %s349
    %p351 = scmp.eq.s32.totalorder %s23, 0
    %p352 = por %p350, %p351
    %p353 = scmp.le.s32.totalorder 1, %s17
    %p354 = scmp.lt.s32.totalorder %s17, 3
    %p355 = pnand %p353, %p354
    %p356 = pneg %p355
    // Predicated region
    $region9: #{model_forward.1} parent=5 // pred_check
      _
    $region10: #{model_forward.1} parent=5 // pred_check_branch
      %358 = sbr.rel (%p355) target = $region12
    $region11: #{model_forward.1} parent=5 // pred_region
      %s359 = ssub.s32 %s17, 1
    $region12: #{model_forward.1} parent=5 // pred_fallthru
      _
    %p360 = scmp.lt.s32.totalorder %s17, 2
    // Predicated region
    $region13: #{model_forward.1} parent=5 // pred_check
      %p361 = pneg %p360
    $region14: #{model_forward.1} parent=5 // pred_check_branch
      %363 = sbr.rel (%p361) target = $region16
    $region15: #{model_forward.1} parent=5 // pred_region
      // Predicated region
      $region17: #{model_forward.1} parent=15 // pred_check
        %p364 = pneg %p51
      $region18: #{model_forward.1} parent=15 // pred_check_branch
        %366 = sbr.rel (%p364) target = $region20
      $region19: #{model_forward.1} parent=15 // pred_region
        %s367 = smul.u32 5, %s25
        %p368 = scmp.lt.s32.totalorder %s24, 1
        %s369 = scalar_select %p368, %s24, 1
        %p370 = scmp.lt.s32.totalorder %s367, 4
        %s371 = scalar_select %p370, %s367, 4
        %s372 = smul.addr %s369, 5
        %s373 = sadd.s32 %s371, %s372
        %s374 = smul.addr %s373, 8
        %s375 = scalar_lea.vmem %s0, %s374
        %s376 = smul.u32 5, %s25
      $region20: #{model_forward.1} parent=15 // pred_fallthru
        _
      // Predicated region
      $region21: #{model_forward.1} parent=15 // pred_check
        %p377 = pneg %p77
      $region22: #{model_forward.1} parent=15 // pred_check_branch
        %379 = sbr.rel (%p377) target = $region24
      $region23: #{model_forward.1} parent=15 // pred_region
        %p380 = scmp.lt.s32.totalorder %s24, 1
        %s381 = scalar_select %p380, %s24, 1
        %s382 = smul.addr %s381, 20
        %s383 = smul.addr %s382, 4
        %s384 = scalar_lea.vmem %s1, %s383
      $region24: #{model_forward.1} parent=15 // pred_fallthru
        _
      // Predicated region
      $region25: #{model_forward.1} parent=15 // pred_check
        %p385 = pneg %p103
      $region26: #{model_forward.1} parent=15 // pred_check_branch
        %387 = sbr.rel (%p385) target = $region28
      $region27: #{model_forward.1} parent=15 // pred_region
        %p388 = scmp.lt.s32.totalorder %s24, 1
        %s389 = scalar_select %p388, %s24, 1
        %s390 = scalar_lea.vmem %s2, %s389
      $region28: #{model_forward.1} parent=15 // pred_fallthru
        _
      // Predicated region
      $region29: #{model_forward.1} parent=15 // pred_check
        %p391 = pneg %p129
      $region30: #{model_forward.1} parent=15 // pred_check_branch
        %393 = sbr.rel (%p391) target = $region32
      $region31: #{model_forward.1} parent=15 // pred_region
        %p394 = scmp.lt.s32.totalorder %s24, 1
        %s395 = scalar_select %p394, %s24, 1
        %s396 = smul.addr %s395, 4
        %s397 = smul.addr %s396, 4
        %s398 = scalar_lea.vmem %s3, %s397
      $region32: #{model_forward.1} parent=15 // pred_fallthru
        _
      // Predicated region
      $region33: #{model_forward.1} parent=15 // pred_check
        %p399 = pneg %p155
      $region34: #{model_forward.1} parent=15 // pred_check_branch
        %401 = sbr.rel (%p399) target = $region36
      $region35: #{model_forward.1} parent=15 // pred_region
        %p402 = scmp.lt.s32.totalorder %s24, 1
        %s403 = scalar_select %p402, %s24, 1
        %s404 = scalar_lea.vmem %s4, %s403
      $region36: #{model_forward.1} parent=15 // pred_fallthru
        _
      // Predicated region
      $region37: #{model_forward.1} parent=15 // pred_check
        %p405 = pneg %p181
      $region38: #{model_forward.1} parent=15 // pred_check_branch
        %407 = sbr.rel (%p405) target = $region40
      $region39: #{model_forward.1} parent=15 // pred_region
        %p408 = scmp.lt.s32.totalorder %s24, 1
        %s409 = scalar_select %p408, %s24, 1
        %s410 = smul.addr %s409, 4
        %s411 = smul.addr %s410, 4
        %s412 = scalar_lea.vmem %s5, %s411
      $region40: #{model_forward.1} parent=15 // pred_fallthru
        _
      // Predicated region
      $region41: #{model_forward.1} parent=15 // pred_check
        %p413 = pneg %p207
      $region42: #{model_forward.1} parent=15 // pred_check_branch
        %415 = sbr.rel (%p413) target = $region44
      $region43: #{model_forward.1} parent=15 // pred_region
        %p416 = scmp.lt.s32.totalorder %s24, 1
        %s417 = scalar_select %p416, %s24, 1
        %s418 = scalar_lea.vmem %s6, %s417
      $region44: #{model_forward.1} parent=15 // pred_fallthru
        _
      // Predicated region
      $region45: #{model_forward.1} parent=15 // pred_check
        %p419 = pneg %p233
      $region46: #{model_forward.1} parent=15 // pred_check_branch
        %421 = sbr.rel (%p419) target = $region48
      $region47: #{model_forward.1} parent=15 // pred_region
        %p422 = scmp.lt.s32.totalorder %s24, 1
        %s423 = scalar_select %p422, %s24, 1
        %s424 = smul.addr %s423, 4
        %s425 = smul.addr %s424, 4
        %s426 = scalar_lea.vmem %s7, %s425
      $region48: #{model_forward.1} parent=15 // pred_fallthru
        _
      // Predicated region
      $region49: #{model_forward.1} parent=15 // pred_check
        %p427 = pneg %p259
      $region50: #{model_forward.1} parent=15 // pred_check_branch
        %429 = sbr.rel (%p427) target = $region52
      $region51: #{model_forward.1} parent=15 // pred_region
        %p430 = scmp.lt.s32.totalorder %s24, 1
        %s431 = scalar_select %p430, %s24, 1
        %s432 = scalar_lea.vmem %s8, %s431
      $region52: #{model_forward.1} parent=15 // pred_fallthru
        _
      // Predicated region
      $region53: #{model_forward.1} parent=15 // pred_check
        %p433 = pneg %p285
      $region54: #{model_forward.1} parent=15 // pred_check_branch
        %435 = sbr.rel (%p433) target = $region56
      $region55: #{model_forward.1} parent=15 // pred_region
        %p436 = scmp.lt.s32.totalorder %s24, 1
        %s437 = scalar_select %p436, %s24, 1
        %s438 = smul.addr %s437, 4
        %s439 = smul.addr %s438, 4
        %s440 = scalar_lea.vmem %s9, %s439
      $region56: #{model_forward.1} parent=15 // pred_fallthru
        _
      // Predicated region
      $region57: #{model_forward.1} parent=15 // pred_check
        %p441 = pneg %p311
      $region58: #{model_forward.1} parent=15 // pred_check_branch
        %443 = sbr.rel (%p441) target = $region60
      $region59: #{model_forward.1} parent=15 // pred_region
        %p444 = scmp.lt.s32.totalorder %s24, 1
        %s445 = scalar_select %p444, %s24, 1
        %s446 = scalar_lea.vmem %s10, %s445
      $region60: #{model_forward.1} parent=15 // pred_fallthru
        _
    $region16: #{model_forward.1} parent=5 // pred_fallthru
      _
    %p447 = scmp.le.s32.totalorder 1, %s17
    %p448 = scmp.lt.s32.totalorder %s17, 3
    %p449 = pnand %p447, %p448
    %p450 = pneg %p449
    // Predicated region
    $region61: #{model_forward.1} parent=5 // pred_check
      _
    $region62: #{model_forward.1} parent=5 // pred_check_branch
      %452 = sbr.rel (%p449) target = $region64
    $region63: #{model_forward.1} parent=5 // pred_region
      %s453 = ssub.s32 %s17, 1
      %s454 = smul.u32 5, %s27
      %p455 = scmp.lt.s32.totalorder %s26, 1
      %s456 = scalar_select %p455, %s26, 1
      %p457 = scmp.lt.s32.totalorder %s454, 4
      %s458 = scalar_select %p457, %s454, 4
      %s459 = smul.addr %s456, 5
      %s460 = sadd.s32 %s458, %s459
      %s461 = smul.addr %s460, 8
      %s462 = scalar_lea.vmem %s0, %s461
      %p463 = pneg %p57
      %p464 = pneg %p54
      %p465 = scmp.lt.s32.totalorder %s26, 1
      %s466 = scalar_select %p465, %s26, 1
      %s467 = smul.addr %s466, 20
      %s468 = smul.addr %s467, 4
      %s469 = scalar_lea.vmem %s1, %s468
      %p470 = pneg %p83
      %p471 = pneg %p80
      %p472 = scmp.lt.s32.totalorder %s26, 1
      %s473 = scalar_select %p472, %s26, 1
      %s474 = scalar_lea.vmem %s2, %s473
      %p475 = pneg %p109
      %p476 = pneg %p106
      %p477 = scmp.lt.s32.totalorder %s26, 1
      %s478 = scalar_select %p477, %s26, 1
      %s479 = smul.addr %s478, 4
      %s480 = smul.addr %s479, 4
      %s481 = scalar_lea.vmem %s3, %s480
      %p482 = pneg %p135
      %p483 = pneg %p132
      %p484 = scmp.lt.s32.totalorder %s26, 1
      %s485 = scalar_select %p484, %s26, 1
      %s486 = scalar_lea.vmem %s4, %s485
      %p487 = pneg %p161
      %p488 = pneg %p158
      %p489 = scmp.lt.s32.totalorder %s26, 1
      %s490 = scalar_select %p489, %s26, 1
      %s491 = smul.addr %s490, 4
      %s492 = smul.addr %s491, 4
      %s493 = scalar_lea.vmem %s5, %s492
      %p494 = pneg %p187
      %p495 = pneg %p184
      %p496 = scmp.lt.s32.totalorder %s26, 1
      %s497 = scalar_select %p496, %s26, 1
      %s498 = scalar_lea.vmem %s6, %s497
      %p499 = pneg %p213
      %p500 = pneg %p210
      %p501 = scmp.lt.s32.totalorder %s26, 1
      %s502 = scalar_select %p501, %s26, 1
      %s503 = smul.addr %s502, 4
      %s504 = smul.addr %s503, 4
      %s505 = scalar_lea.vmem %s7, %s504
      %p506 = pneg %p239
      %p507 = pneg %p236
      %p508 = scmp.lt.s32.totalorder %s26, 1
      %s509 = scalar_select %p508, %s26, 1
      %s510 = scalar_lea.vmem %s8, %s509
      %p511 = pneg %p265
      %p512 = pneg %p262
      %p513 = scmp.lt.s32.totalorder %s26, 1
      %s514 = scalar_select %p513, %s26, 1
      %s515 = smul.addr %s514, 4
      %s516 = smul.addr %s515, 4
      %s517 = scalar_lea.vmem %s9, %s516
      %p518 = pneg %p291
      %p519 = pneg %p288
      %p520 = scmp.lt.s32.totalorder %s26, 1
      %s521 = scalar_select %p520, %s26, 1
      %s522 = scalar_lea.vmem %s10, %s521
      %p523 = pneg %p317
      %p524 = pneg %p314
      %p525 = pneg %p345
      %p526 = pneg %p342
      %p527 = scmp.lt.s32.totalorder %s26, 1
      %s528 = scalar_select %p527, %s26, 1
      %p529 = scmp.lt.s32.totalorder %s27, 0
      %s530 = scalar_select %p529, %s27, 0
      %s531 = sadd.s32 %s530, %s528
      %s532 = smul.addr %s531, 8
      %s533 = scalar_lea.vmem %s11, %s532
      %s534 = smul.u32 5, %s27
      %p535 = scmp.lt.s32.totalorder %s26, 1
      %s536 = scalar_select %p535, %s26, 1
      %p537 = scmp.lt.s32.totalorder %s534, 4
      %s538 = scalar_select %p537, %s534, 4
      %s539 = smul.addr %s536, 5
      %s540 = sadd.s32 %s538, %s539
      %s541 = smul.addr %s540, 8
      %s542 = scalar_lea.vmem %s0, %s541
      %s543 = smul.u32 5, %s27
      %p544 = scmp.lt.s32.totalorder %s26, 1
      %s545 = scalar_select %p544, %s26, 1
      %s546 = smul.addr %s545, 20
      %s547 = smul.addr %s546, 4
      %s548 = scalar_lea.vmem %s1, %s547
      %p549 = scmp.lt.s32.totalorder %s26, 1
      %s550 = scalar_select %p549, %s26, 1
      %s551 = scalar_lea.vmem %s2, %s550
      %p552 = scmp.lt.s32.totalorder %s26, 1
      %s553 = scalar_select %p552, %s26, 1
      %s554 = smul.addr %s553, 4
      %s555 = smul.addr %s554, 4
      %s556 = scalar_lea.vmem %s3, %s555
      %p557 = scmp.lt.s32.totalorder %s26, 1
      %s558 = scalar_select %p557, %s26, 1
      %s559 = scalar_lea.vmem %s4, %s558
      %p560 = scmp.lt.s32.totalorder %s26, 1
      %s561 = scalar_select %p560, %s26, 1
      %s562 = smul.addr %s561, 4
      %s563 = smul.addr %s562, 4
      %s564 = scalar_lea.vmem %s5, %s563
      %p565 = scmp.lt.s32.totalorder %s26, 1
      %s566 = scalar_select %p565, %s26, 1
      %s567 = scalar_lea.vmem %s6, %s566
      %p568 = scmp.lt.s32.totalorder %s26, 1
      %s569 = scalar_select %p568, %s26, 1
      %s570 = smul.addr %s569, 4
      %s571 = smul.addr %s570, 4
      %s572 = scalar_lea.vmem %s7, %s571
      %p573 = scmp.lt.s32.totalorder %s26, 1
      %s574 = scalar_select %p573, %s26, 1
      %s575 = scalar_lea.vmem %s8, %s574
      %p576 = scmp.lt.s32.totalorder %s26, 1
      %s577 = scalar_select %p576, %s26, 1
      %s578 = smul.addr %s577, 4
      %s579 = smul.addr %s578, 4
      %s580 = scalar_lea.vmem %s9, %s579
      %p581 = scmp.lt.s32.totalorder %s26, 1
      %s582 = scalar_select %p581, %s26, 1
      %s583 = scalar_lea.vmem %s10, %s582
      %p584 = scmp.lt.s32.totalorder %s26, 1
      %s585 = scalar_select %p584, %s26, 1
      %p586 = scmp.lt.s32.totalorder %s27, 0
      %s587 = scalar_select %p586, %s27, 0
      %s588 = sadd.s32 %s587, %s585
      %s589 = smul.addr %s588, 8
      %s590 = scalar_lea.vmem %s11, %s589
      %v592 = vld [vmem:[%s542] sm:$0xff]
      %v593 = vld [vmem:[%s542 + $0x8] sm:$0xff]
      %v594 = vld [vmem:[%s542 + $0x10] sm:$0xff]
      %v595 = vld [vmem:[%s542 + $0x18] sm:$0xff]
      %v596 = vld [vmem:[%s542 + $0x20] sm:$0xff]
      %v597 = vpack.c.bf16 %v593, %v592
      %v598 = vpack.c.bf16 %v595, %v594
      %v599 = vpack.c.bf16 %v596, %v596
      %v600 = vld [vmem:[%s556] sm:$0xf]
      %v601 = vld [vmem:[%s556 + $0x4] sm:$0xf]
      %v602 = vld [vmem:[%s556 + $0x8] sm:$0xf]
      %v603 = vld [vmem:[%s556 + $0xc] sm:$0xf]
      %v604 = vld [vmem:[%s559] sm:$0x1]
      %v606 = vperm.slane %v604, 0
      %v612 = vunpack.c.l.b16 %v600
      %v613 = vunpack.c.l.b16 %v601
      %v614 = vunpack.c.l.b16 %v602
      %v615 = vunpack.c.l.b16 %v603
      %v616 = vpack.c.b16 %v613, %v612
      %v617 = vpack.c.b16 %v615, %v614
      %vm620 = vcmask 261120
      %v622 = vsel %vm620, %v597, 0
      %v625 = vsel %vm620, %v598, 0
      %v628 = vsel %vm620, %v599, 0
      %630 = vmatpush.bf16.msra.mxu0 0
      %631 = vmatpush.bf16.msra.mxu0 0
      %632 = vmatpush.bf16.msra.mxu0 0
      %633 = vmatpush.bf16.msra.mxu0 0
      %634 = vmatpush.bf16.msra.mxu0 0
      %635 = vmatpush.bf16.msra.mxu0 0
      %636 = vmatpush.bf16.msra.mxu0 %v617
      %637 = vmatpush.bf16.msra.mxu0 %v616
      %638 = vmatmul.bf16.gmra.mxu0 %v622
      %v639 = vpop.f32.mrf.mxu0
      %v640 = vadd.f32 %v606, %v639
      %v641 = vpop.f32.mrf.mxu0
      %v642 = vadd.f32 %v606, %v641
      %643 = vmatmul.bf16.gmra.mxu0 %v625
      %v644 = vpop.f32.mrf.mxu0
      %v645 = vadd.f32 %v606, %v644
      %v646 = vpop.f32.mrf.mxu0
      %v647 = vadd.f32 %v606, %v646
      %648 = vmatmul.bf16.gmra.mxu0 %v628
      %v649 = vpop.f32.mrf.mxu0
      %v650 = vadd.f32 %v606, %v649
      %v651 = vpop.f32.mrf.mxu0
      %652 = vdwg.mxu0
      %v653 = vpack.c.bf16 %v640, %v640
      %v654 = vpack.c.bf16 %v642, %v642
      %v655 = vpack.c.bf16 %v645, %v645
      %v656 = vpack.c.bf16 %v647, %v647
      %v657 = vpack.c.bf16 %v650, %v650
      %v663 = vrot.slane %v653, 3
      %v664 = vrot.slane %v654, 3
      %v665 = vrot.slane %v655, 3
      %v666 = vrot.slane %v656, 3
      %v667 = vrot.slane %v657, 3
      %vm668 = vcmask 1040384
      %v671 = vsel %vm668, %v653, %v663
      %vm673 = vcmask 1041409
      %v674 = vsel %vm673, %v653, %v663
      %v676 = vrot.slane %v674, 1
      %vm677 = vcmask 1042434
      %v678 = vsel %vm677, %v653, %v663
      %v680 = vrot.slane %v678, 2
      %vm681 = vcmask 1043459
      %v682 = vsel %vm681, %v653, %v663
      %v684 = vrot.slane %v682, 3
      %v687 = vsel %vm668, %v654, %v664
      %v689 = vsel %vm673, %v654, %v664
      %v691 = vrot.slane %v689, 1
      %v692 = vsel %vm677, %v654, %v664
      %v694 = vrot.slane %v692, 2
      %v695 = vsel %vm681, %v654, %v664
      %v697 = vrot.slane %v695, 3
      %v700 = vsel %vm668, %v655, %v665
      %v702 = vsel %vm673, %v655, %v665
      %v704 = vrot.slane %v702, 1
      %v705 = vsel %vm677, %v655, %v665
      %v707 = vrot.slane %v705, 2
      %v708 = vsel %vm681, %v655, %v665
      %v710 = vrot.slane %v708, 3
      %v713 = vsel %vm668, %v656, %v666
      %v715 = vsel %vm673, %v656, %v666
      %v717 = vrot.slane %v715, 1
      %v718 = vsel %vm677, %v656, %v666
      %v720 = vrot.slane %v718, 2
      %v721 = vsel %vm681, %v656, %v666
      %v723 = vrot.slane %v721, 3
      %v726 = vsel %vm668, %v657, %v667
      %v728 = vsel %vm673, %v657, %v667
      %v730 = vrot.slane %v728, 1
      %v731 = vsel %vm677, %v657, %v667
      %v733 = vrot.slane %v731, 2
      %v734 = vsel %vm681, %v657, %v667
      %v736 = vrot.slane %v734, 3
      %v737 = vunpack.i.l.s16 %v671
      %v738 = vunpack.i.h.s16 %v671
      %v739 = vunpack.i.l.s16 %v676
      %v740 = vunpack.i.h.s16 %v676
      %v741 = vunpack.i.l.s16 %v680
      %v742 = vunpack.i.h.s16 %v680
      %v743 = vunpack.i.l.s16 %v684
      %v744 = vunpack.i.h.s16 %v684
      %v745 = vunpack.i.l.s16 %v687
      %v746 = vunpack.i.h.s16 %v687
      %v747 = vunpack.i.l.s16 %v691
      %v748 = vunpack.i.h.s16 %v691
      %v749 = vunpack.i.l.s16 %v694
      %v750 = vunpack.i.h.s16 %v694
      %v751 = vunpack.i.l.s16 %v697
      %v752 = vunpack.i.h.s16 %v697
      %v753 = vunpack.i.l.s16 %v700
      %v754 = vunpack.i.h.s16 %v700
      %v755 = vunpack.i.l.s16 %v704
      %v756 = vunpack.i.h.s16 %v704
      %v757 = vunpack.i.l.s16 %v707
      %v758 = vunpack.i.h.s16 %v707
      %v759 = vunpack.i.l.s16 %v710
      %v760 = vunpack.i.h.s16 %v710
      %v761 = vunpack.i.l.s16 %v713
      %v762 = vunpack.i.h.s16 %v713
      %v763 = vunpack.i.l.s16 %v717
      %v764 = vunpack.i.h.s16 %v717
      %v765 = vunpack.i.l.s16 %v720
      %v766 = vunpack.i.h.s16 %v720
      %v767 = vunpack.i.l.s16 %v723
      %v768 = vunpack.i.h.s16 %v723
      %v769 = vunpack.i.l.s16 %v726
      %v770 = vunpack.i.h.s16 %v726
      %v771 = vunpack.i.l.s16 %v730
      %v772 = vunpack.i.h.s16 %v730
      %v773 = vunpack.i.l.s16 %v733
      %v774 = vunpack.i.h.s16 %v733
      %v775 = vunpack.i.l.s16 %v736
      %v776 = vunpack.i.h.s16 %v736
      %v777 = vpack.i.b16 %v738, %v737
      %v778 = vpack.i.b16 %v740, %v739
      %781 = vst [vmem:[#allocation1] ss:$9 sm:$0xff] %v777
      %s783 = scalar_lea.vmem [#allocation1], 1
      %784 = vst [vmem:[%s783] ss:$9 sm:$0xff] %v778
      %s786 = scalar_lea.vmem [#allocation1], 2
      %787 = vst [vmem:[%s786] ss:$9 sm:$0xff] %v741
      %v788 = vld [vmem:[#allocation1] sm:$0xff]
      %789 = vst [vmem:[#allocation1] ss:$9 sm:$0xff] %v777
      %s790 = scalar_lea.vmem [#allocation1], 1
      %791 = vst [vmem:[%s790] ss:$9 sm:$0xff] %v778
      %s792 = scalar_lea.vmem [#allocation1], 2
      %793 = vst [vmem:[%s792] ss:$9 sm:$0xff] %v741
      %v794 = vld [vmem:[#allocation1] sm:$0xff]
      %796 = vrot.lane.b32.xlu0 %v794, 96
      %v797 = vpop.permute.xlu0 %796
      %vm798 = vcmask 130048
      %v799 = vsel %vm798, %v788, 0
      %v802 = vsel %vm798, %v797, 0
      %804 = vmatpush.bf16.xpose.msra.mxu0 0
      %805 = vmatpush.bf16.xpose.msra.mxu0 0
      %806 = vmatpush.bf16.xpose.msra.mxu0 0
      %807 = vmatpush.bf16.xpose.msra.mxu0 0
      %808 = vmatpush.bf16.xpose.msra.mxu0 0
      %809 = vmatpush.bf16.xpose.msra.mxu0 0
      %810 = vmatpush.bf16.xpose.msra.mxu0 0
      %811 = vmatpush.bf16.xpose.msra.mxu0 %v802
      %812 = vmatmul.bf16.gmra.mxu0 %v799
      %v813 = vpop.f32.mrf.mxu0
      %v814 = vadd.f32 0.0, %v813
      %v815 = vpop.f32.mrf.mxu0
      %816 = vdwg.mxu0
      %v817 = vpack.i.b16 %v743, %v742
      %v818 = vpack.i.b16 %v745, %v744
      %821 = vst [vmem:[#allocation1] ss:$9 sm:$0xff] %v817
      %s823 = scalar_lea.vmem [#allocation1], 1
      %824 = vst [vmem:[%s823] ss:$9 sm:$0xff] %v818
      %s826 = scalar_lea.vmem [#allocation1], 2
      %827 = vst [vmem:[%s826] ss:$9 sm:$0xff] %v746
      %v828 = vld [vmem:[#allocation1] sm:$0xff]
      %829 = vst [vmem:[#allocation1] ss:$9 sm:$0xff] %v817
      %s830 = scalar_lea.vmem [#allocation1], 1
      %831 = vst [vmem:[%s830] ss:$9 sm:$0xff] %v818
      %s832 = scalar_lea.vmem [#allocation1], 2
      %833 = vst [vmem:[%s832] ss:$9 sm:$0xff] %v746
      %v834 = vld [vmem:[#allocation1] sm:$0xff]
      %836 = vrot.lane.b32.xlu0 %v834, 96
      %v837 = vpop.permute.xlu0 %836
      %v838 = vsel %vm798, %v828, 0
      %v841 = vsel %vm798, %v837, 0
      %843 = vmatpush.bf16.xpose.msra.mxu0 0
      %844 = vmatpush.bf16.xpose.msra.mxu0 0
      %845 = vmatpush.bf16.xpose.msra.mxu0 0
      %846 = vmatpush.bf16.xpose.msra.mxu0 0
      %847 = vmatpush.bf16.xpose.msra.mxu0 0
      %848 = vmatpush.bf16.xpose.msra.mxu0 0
      %849 = vmatpush.bf16.xpose.msra.mxu0 0
      %850 = vmatpush.bf16.xpose.msra.mxu0 %v841
      %851 = vmatmul.bf16.gmra.mxu0 %v838
      %v852 = vpop.f32.mrf.mxu0
      %v853 = vadd.f32 0.0, %v852
      %v854 = vpop.f32.mrf.mxu0
      %855 = vdwg.mxu0
      %v856 = vpack.i.b16 %v748, %v747
      %v857 = vpack.i.b16 %v750, %v749
      %860 = vst [vmem:[#allocation1] ss:$9 sm:$0xff] %v856
      %s862 = scalar_lea.vmem [#allocation1], 1
      %863 = vst [vmem:[%s862] ss:$9 sm:$0xff] %v857
      %s865 = scalar_lea.vmem [#allocation1], 2
      %866 = vst [vmem:[%s865] ss:$9 sm:$0xff] %v751
      %v867 = vld [vmem:[#allocation1] sm:$0xff]
      %868 = vst [vmem:[#allocation1] ss:$9 sm:$0xff] %v856
      %s869 = scalar_lea.vmem [#allocation1], 1
      %870 = vst [vmem:[%s869] ss:$9 sm:$0xff] %v857
      %s871 = scalar_lea.vmem [#allocation1], 2
      %872 = vst [vmem:[%s871] ss:$9 sm:$0xff] %v751
      %v873 = vld [vmem:[#allocation1] sm:$0xff]
      %875 = vrot.lane.b32.xlu0 %v873, 96
      %v876 = vpop.permute.xlu0 %875
      %v877 = vsel %vm798, %v867, 0
      %v880 = vsel %vm798, %v876, 0
      %882 = vmatpush.bf16.xpose.msra.mxu0 0
      %883 = vmatpush.bf16.xpose.msra.mxu0 0
      %884 = vmatpush.bf16.xpose.msra.mxu0 0
      %885 = vmatpush.bf16.xpose.msra.mxu0 0
      %886 = vmatpush.bf16.xpose.msra.mxu0 0
      %887 = vmatpush.bf16.xpose.msra.mxu0 0
      %888 = vmatpush.bf16.xpose.msra.mxu0 0
      %889 = vmatpush.bf16.xpose.msra.mxu0 %v880
      %890 = vmatmul.bf16.gmra.mxu0 %v877
      %v891 = vpop.f32.mrf.mxu0
      %v892 = vadd.f32 0.0, %v891
      %v893 = vpop.f32.mrf.mxu0
      %894 = vdwg.mxu0
      %v895 = vpack.i.b16 %v753, %v752
      %v896 = vpack.i.b16 %v755, %v754
      %899 = vst [vmem:[#allocation1] ss:$9 sm:$0xff] %v895
      %s901 = scalar_lea.vmem [#allocation1], 1
      %902 = vst [vmem:[%s901] ss:$9 sm:$0xff] %v896
      %s904 = scalar_lea.vmem [#allocation1], 2
      %905 = vst [vmem:[%s904] ss:$9 sm:$0xff] %v756
      %v906 = vld [vmem:[#allocation1] sm:$0xff]
      %907 = vst [vmem:[#allocation1] ss:$9 sm:$0xff] %v895
      %s908 = scalar_lea.vmem [#allocation1], 1
      %909 = vst [vmem:[%s908] ss:$9 sm:$0xff] %v896
      %s910 = scalar_lea.vmem [#allocation1], 2
      %911 = vst [vmem:[%s910] ss:$9 sm:$0xff] %v756
      %v912 = vld [vmem:[#allocation1] sm:$0xff]
      %914 = vrot.lane.b32.xlu0 %v912, 96
      %v915 = vpop.permute.xlu0 %914
      %v916 = vsel %vm798, %v906, 0
      %v919 = vsel %vm798, %v915, 0
      %921 = vmatpush.bf16.xpose.msra.mxu0 0
      %922 = vmatpush.bf16.xpose.msra.mxu0 0
      %923 = vmatpush.bf16.xpose.msra.mxu0 0
      %924 = vmatpush.bf16.xpose.msra.mxu0 0
      %925 = vmatpush.bf16.xpose.msra.mxu0 0
      %926 = vmatpush.bf16.xpose.msra.mxu0 0
      %927 = vmatpush.bf16.xpose.msra.mxu0 0
      %928 = vmatpush.bf16.xpose.msra.mxu0 %v919
      %929 = vmatmul.bf16.gmra.mxu0 %v916
      %v930 = vpop.f32.mrf.mxu0
      %v931 = vadd.f32 0.0, %v930
      %v932 = vpop.f32.mrf.mxu0
      %933 = vdwg.mxu0
      %v934 = vpack.i.b16 %v758, %v757
      %v935 = vpack.i.b16 %v760, %v759
      %938 = vst [vmem:[#allocation1] ss:$9 sm:$0xff] %v934
      %s940 = scalar_lea.vmem [#allocation1], 1
      %941 = vst [vmem:[%s940] ss:$9 sm:$0xff] %v935
      %s943 = scalar_lea.vmem [#allocation1], 2
      %944 = vst [vmem:[%s943] ss:$9 sm:$0xff] %v761
      %v945 = vld [vmem:[#allocation1] sm:$0xff]
      %946 = vst [vmem:[#allocation1] ss:$9 sm:$0xff] %v934
      %s947 = scalar_lea.vmem [#allocation1], 1
      %948 = vst [vmem:[%s947] ss:$9 sm:$0xff] %v935
      %s949 = scalar_lea.vmem [#allocation1], 2
      %950 = vst [vmem:[%s949] ss:$9 sm:$0xff] %v761
      %v951 = vld [vmem:[#allocation1] sm:$0xff]
      %953 = vrot.lane.b32.xlu0 %v951, 96
      %v954 = vpop.permute.xlu0 %953
      %v955 = vsel %vm798, %v945, 0
      %v958 = vsel %vm798, %v954, 0
      %960 = vmatpush.bf16.xpose.msra.mxu0 0
      %961 = vmatpush.bf16.xpose.msra.mxu0 0
      %962 = vmatpush.bf16.xpose.msra.mxu0 0
      %963 = vmatpush.bf16.xpose.msra.mxu0 0
      %964 = vmatpush.bf16.xpose.msra.mxu0 0
      %965 = vmatpush.bf16.xpose.msra.mxu0 0
      %966 = vmatpush.bf16.xpose.msra.mxu0 0
      %967 = vmatpush.bf16.xpose.msra.mxu0 %v958
      %968 = vmatmul.bf16.gmra.mxu0 %v955
      %v969 = vpop.f32.mrf.mxu0
      %v970 = vadd.f32 0.0, %v969
      %v971 = vpop.f32.mrf.mxu0
      %972 = vdwg.mxu0
      %v973 = vpack.i.b16 %v763, %v762
      %v974 = vpack.i.b16 %v765, %v764
      %977 = vst [vmem:[#allocation1] ss:$9 sm:$0xff] %v973
      %s979 = scalar_lea.vmem [#allocation1], 1
      %980 = vst [vmem:[%s979] ss:$9 sm:$0xff] %v974
      %s982 = scalar_lea.vmem [#allocation1], 2
      %983 = vst [vmem:[%s982] ss:$9 sm:$0xff] %v766
      %v984 = vld [vmem:[#allocation1] sm:$0xff]
      %985 = vst [vmem:[#allocation1] ss:$9 sm:$0xff] %v973
      %s986 = scalar_lea.vmem [#allocation1], 1
      %987 = vst [vmem:[%s986] ss:$9 sm:$0xff] %v974
      %s988 = scalar_lea.vmem [#allocation1], 2
      %989 = vst [vmem:[%s988] ss:$9 sm:$0xff] %v766
      %v990 = vld [vmem:[#allocation1] sm:$0xff]
      %992 = vrot.lane.b32.xlu0 %v990, 96
      %v993 = vpop.permute.xlu0 %992
      %v994 = vsel %vm798, %v984, 0
      %v997 = vsel %vm798, %v993, 0
      %999 = vmatpush.bf16.xpose.msra.mxu0 0
      %1000 = vmatpush.bf16.xpose.msra.mxu0 0
      %1001 = vmatpush.bf16.xpose.msra.mxu0 0
      %1002 = vmatpush.bf16.xpose.msra.mxu0 0
      %1003 = vmatpush.bf16.xpose.msra.mxu0 0
      %1004 = vmatpush.bf16.xpose.msra.mxu0 0
      %1005 = vmatpush.bf16.xpose.msra.mxu0 0
      %1006 = vmatpush.bf16.xpose.msra.mxu0 %v997
      %1007 = vmatmul.bf16.gmra.mxu0 %v994
      %v1008 = vpop.f32.mrf.mxu0
      %v1009 = vadd.f32 0.0, %v1008
      %v1010 = vpop.f32.mrf.mxu0
      %1011 = vdwg.mxu0
      %v1012 = vpack.i.b16 %v768, %v767
      %v1013 = vpack.i.b16 %v770, %v769
      %1016 = vst [vmem:[#allocation1] ss:$9 sm:$0xff] %v1012
      %s1018 = scalar_lea.vmem [#allocation1], 1
      %1019 = vst [vmem:[%s1018] ss:$9 sm:$0xff] %v1013
      %s1021 = scalar_lea.vmem [#allocation1], 2
      %1022 = vst [vmem:[%s1021] ss:$9 sm:$0xff] %v771
      %v1023 = vld [vmem:[#allocation1] sm:$0xff]
      %1024 = vst [vmem:[#allocation1] ss:$9 sm:$0xff] %v1012
      %s1025 = scalar_lea.vmem [#allocation1], 1
      %1026 = vst [vmem:[%s1025] ss:$9 sm:$0xff] %v1013
      %s1027 = scalar_lea.vmem [#allocation1], 2
      %1028 = vst [vmem:[%s1027] ss:$9 sm:$0xff] %v771
      %v1029 = vld [vmem:[#allocation1] sm:$0xff]
      %1031 = vrot.lane.b32.xlu0 %v1029, 96
      %v1032 = vpop.permute.xlu0 %1031
      %v1033 = vsel %vm798, %v1023, 0
      %v1036 = vsel %vm798, %v1032, 0
      %1038 = vmatpush.bf16.xpose.msra.mxu0 0
      %1039 = vmatpush.bf16.xpose.msra.mxu0 0
      %1040 = vmatpush.bf16.xpose.msra.mxu0 0
      %1041 = vmatpush.bf16.xpose.msra.mxu0 0
      %1042 = vmatpush.bf16.xpose.msra.mxu0 0
      %1043 = vmatpush.bf16.xpose.msra.mxu0 0
      %1044 = vmatpush.bf16.xpose.msra.mxu0 0
      %1045 = vmatpush.bf16.xpose.msra.mxu0 %v1036
      %1046 = vmatmul.bf16.gmra.mxu0 %v1033
      %v1047 = vpop.f32.mrf.mxu0
      %v1048 = vadd.f32 0.0, %v1047
      %v1049 = vpop.f32.mrf.mxu0
      %1050 = vdwg.mxu0
      %v1051 = vpack.i.b16 %v773, %v772
      %v1052 = vpack.i.b16 %v775, %v774
      %1055 = vst [vmem:[#allocation1] ss:$9 sm:$0xff] %v1051
      %s1057 = scalar_lea.vmem [#allocation1], 1
      %1058 = vst [vmem:[%s1057] ss:$9 sm:$0xff] %v1052
      %s1060 = scalar_lea.vmem [#allocation1], 2
      %1061 = vst [vmem:[%s1060] ss:$9 sm:$0xff] %v776
      %v1062 = vld [vmem:[#allocation1] sm:$0xff]
      %1063 = vst [vmem:[#allocation1] ss:$9 sm:$0xff] %v1051
      %s1064 = scalar_lea.vmem [#allocation1], 1
      %1065 = vst [vmem:[%s1064] ss:$9 sm:$0xff] %v1052
      %s1066 = scalar_lea.vmem [#allocation1], 2
      %1067 = vst [vmem:[%s1066] ss:$9 sm:$0xff] %v776
      %v1068 = vld [vmem:[#allocation1] sm:$0xff]
      %1070 = vrot.lane.b32.xlu0 %v1068, 96
      %v1071 = vpop.permute.xlu0 %1070
      %v1072 = vsel %vm798, %v1062, 0
      %v1075 = vsel %vm798, %v1071, 0
      %1077 = vmatpush.bf16.xpose.msra.mxu0 0
      %1078 = vmatpush.bf16.xpose.msra.mxu0 0
      %1079 = vmatpush.bf16.xpose.msra.mxu0 0
      %1080 = vmatpush.bf16.xpose.msra.mxu0 0
      %1081 = vmatpush.bf16.xpose.msra.mxu0 0
      %1082 = vmatpush.bf16.xpose.msra.mxu0 0
      %1083 = vmatpush.bf16.xpose.msra.mxu0 0
      %1084 = vmatpush.bf16.xpose.msra.mxu0 %v1075
      %1085 = vmatmul.bf16.gmra.mxu0 %v1072
      %v1086 = vpop.f32.mrf.mxu0
      %v1087 = vadd.f32 0.0, %v1086
      %v1088 = vpop.f32.mrf.mxu0
      %1089 = vdwg.mxu0
      %v1090 = vmul.f32 %v814, 0.25
      %v1091 = vmul.f32 %v853, 0.25
      %v1092 = vmul.f32 %v892, 0.25
      %v1093 = vmul.f32 %v931, 0.25
      %v1094 = vmul.f32 %v970, 0.25
      %v1095 = vmul.f32 %v1009, 0.25
      %v1096 = vmul.f32 %v1048, 0.25
      %v1097 = vmul.f32 %v1087, 0.25
      %vm1098 = vcmask 36864
      %v1099 = vsel %vm1098, %v1090, -inf
      %1100 = vmax.xlane.f32.xlu0 %v1099
      %v1101 = vpop.xlane.xlu0 %1100
      %v1102 = vsel %vm1098, %v1091, -inf
      %1103 = vmax.xlane.f32.xlu0 %v1102
      %v1104 = vpop.xlane.xlu0 %1103
      %v1105 = vsel %vm1098, %v1092, -inf
      %1106 = vmax.xlane.f32.xlu0 %v1105
      %v1107 = vpop.xlane.xlu0 %1106
      %v1108 = vsel %vm1098, %v1093, -inf
      %1109 = vmax.xlane.f32.xlu0 %v1108
      %v1110 = vpop.xlane.xlu0 %1109
      %v1111 = vsel %vm1098, %v1094, -inf
      %1112 = vmax.xlane.f32.xlu0 %v1111
      %v1113 = vpop.xlane.xlu0 %1112
      %v1114 = vsel %vm1098, %v1095, -inf
      %1115 = vmax.xlane.f32.xlu0 %v1114
      %v1116 = vpop.xlane.xlu0 %1115
      %v1117 = vsel %vm1098, %v1096, -inf
      %1118 = vmax.xlane.f32.xlu0 %v1117
      %v1119 = vpop.xlane.xlu0 %1118
      %v1120 = vsel %vm1098, %v1097, -inf
      %1121 = vmax.xlane.f32.xlu0 %v1120
      %v1122 = vpop.xlane.xlu0 %1121
      %v1123 = vsub.f32 %v1090, %v1101
      %v1124 = vsub.f32 %v1091, %v1104
      %v1125 = vsub.f32 %v1092, %v1107
      %v1126 = vsub.f32 %v1093, %v1110
      %v1127 = vsub.f32 %v1094, %v1113
      %v1128 = vsub.f32 %v1095, %v1116
      %v1129 = vsub.f32 %v1096, %v1119
      %v1130 = vsub.f32 %v1097, %v1122
      %v1131 = vmul.f32 %v1123, 1.442695
      %v1132 = vpow.pop %v1131
      %v1133 = vmul.f32 %v1124, 1.442695
      %v1134 = vpow.pop %v1133
      %v1135 = vmul.f32 %v1125, 1.442695
      %v1136 = vpow.pop %v1135
      %v1137 = vmul.f32 %v1126, 1.442695
      %v1138 = vpow.pop %v1137
      %v1139 = vmul.f32 %v1127, 1.442695
      %v1140 = vpow.pop %v1139
      %v1141 = vmul.f32 %v1128, 1.442695
      %v1142 = vpow.pop %v1141
      %v1143 = vmul.f32 %v1129, 1.442695
      %v1144 = vpow.pop %v1143
      %v1145 = vmul.f32 %v1130, 1.442695
      %v1146 = vpow.pop %v1145
      %v1147 = vsel %vm1098, %v1132, 0.0
      %1148 = vadd.xlane.f32.xlu0 %v1147
      %v1149 = vpop.xlane.xlu0 %1148
      %v1150 = vsel %vm1098, %v1134, 0.0
      %1151 = vadd.xlane.f32.xlu0 %v1150
      %v1152 = vpop.xlane.xlu0 %1151
      %v1153 = vsel %vm1098, %v1136, 0.0
      %1154 = vadd.xlane.f32.xlu0 %v1153
      %v1155 = vpop.xlane.xlu0 %1154
      %v1156 = vsel %vm1098, %v1138, 0.0
      %1157 = vadd.xlane.f32.xlu0 %v1156
      %v1158 = vpop.xlane.xlu0 %1157
      %v1159 = vsel %vm1098, %v1140, 0.0
      %1160 = vadd.xlane.f32.xlu0 %v1159
      %v1161 = vpop.xlane.xlu0 %1160
      %v1162 = vsel %vm1098, %v1142, 0.0
      %1163 = vadd.xlane.f32.xlu0 %v1162
      %v1164 = vpop.xlane.xlu0 %1163
      %v1165 = vsel %vm1098, %v1144, 0.0
      %1166 = vadd.xlane.f32.xlu0 %v1165
      %v1167 = vpop.xlane.xlu0 %1166
      %v1168 = vsel %vm1098, %v1146, 0.0
      %1169 = vadd.xlane.f32.xlu0 %v1168
      %v1170 = vpop.xlane.xlu0 %1169
      %v1171 = vrcp.pop %v1149
      %v1172 = vrcp.pop %v1152
      %v1173 = vrcp.pop %v1155
      %v1174 = vrcp.pop %v1158
      %v1175 = vrcp.pop %v1161
      %v1176 = vrcp.pop %v1164
      %v1177 = vrcp.pop %v1167
      %v1178 = vrcp.pop %v1170
      %v1179 = vmul.f32 %v1132, %v1171
      %v1180 = vmul.f32 %v1134, %v1172
      %v1181 = vmul.f32 %v1136, %v1173
      %v1182 = vmul.f32 %v1138, %v1174
      %v1183 = vmul.f32 %v1140, %v1175
      %v1184 = vmul.f32 %v1142, %v1176
      %v1185 = vmul.f32 %v1144, %v1177
      %v1186 = vmul.f32 %v1146, %v1178
      %v1187 = vpack.c.bf16 %v1179, %v1179
      %v1188 = vpack.c.bf16 %v1180, %v1180
      %v1189 = vpack.c.bf16 %v1181, %v1181
      %v1190 = vpack.c.bf16 %v1182, %v1182
      %v1191 = vpack.c.bf16 %v1183, %v1183
      %v1192 = vpack.c.bf16 %v1184, %v1184
      %v1193 = vpack.c.bf16 %v1185, %v1185
      %v1194 = vpack.c.bf16 %v1186, %v1186
      %1195 = vst [vmem:[#allocation1] ss:$9 sm:$0xff] %v777
      %s1196 = scalar_lea.vmem [#allocation1], 1
      %1197 = vst [vmem:[%s1196] ss:$9 sm:$0xff] %v778
      %s1198 = scalar_lea.vmem [#allocation1], 2
      %1199 = vst [vmem:[%s1198] ss:$9 sm:$0xff] %v741
      %v1200 = vld [vmem:[#allocation1] sm:$0xff]
      %1202 = vrot.lane.b32.xlu0 %v1200, 64
      %v1203 = vpop.permute.xlu0 %1202
      %vm1204 = vcmask 39936
      %v1206 = vsel %vm1204, %v1187, 0
      %vm1208 = vcmask 1041408
      %vm1209 = vcmask 1042432
      %v1210 = vsel %vm1208, 4294967295, 65535
      %v1211 = vsel %vm1209, %v1210, 0
      %v1213 = vand.u32 %v1203, %v1211
      %1215 = vmatpush.bf16.msra.mxu0 0
      %1216 = vmatpush.bf16.msra.mxu0 0
      %1217 = vmatpush.bf16.msra.mxu0 0
      %1218 = vmatpush.bf16.msra.mxu0 0
      %1219 = vmatpush.bf16.msra.mxu0 0
      %1220 = vmatpush.bf16.msra.mxu0 0
      %1221 = vmatpush.bf16.msra.mxu0 0
      %1222 = vmatpush.bf16.msra.mxu0 %v1213
      %1223 = vmatmul.bf16.gmra.mxu0 %v1206
      %v1224 = vpop.f32.mrf.mxu0
      %v1225 = vadd.f32 0.0, %v1224
      %v1226 = vpop.f32.mrf.mxu0
      %1227 = vdwg.mxu0
      %1228 = vst [vmem:[#allocation1] ss:$9 sm:$0xff] %v817
      %s1229 = scalar_lea.vmem [#allocation1], 1
      %1230 = vst [vmem:[%s1229] ss:$9 sm:$0xff] %v818
      %s1231 = scalar_lea.vmem [#allocation1], 2
      %1232 = vst [vmem:[%s1231] ss:$9 sm:$0xff] %v746
      %v1233 = vld [vmem:[#allocation1] sm:$0xff]
      %1235 = vrot.lane.b32.xlu0 %v1233, 64
      %v1236 = vpop.permute.xlu0 %1235
      %v1238 = vsel %vm1204, %v1188, 0
      %v1241 = vand.u32 %v1236, %v1211
      %1243 = vmatpush.bf16.msra.mxu0 0
      %1244 = vmatpush.bf16.msra.mxu0 0
      %1245 = vmatpush.bf16.msra.mxu0 0
      %1246 = vmatpush.bf16.msra.mxu0 0
      %1247 = vmatpush.bf16.msra.mxu0 0
      %1248 = vmatpush.bf16.msra.mxu0 0
      %1249 = vmatpush.bf16.msra.mxu0 0
      %1250 = vmatpush.bf16.msra.mxu0 %v1241
      %1251 = vmatmul.bf16.gmra.mxu0 %v1238
      %v1252 = vpop.f32.mrf.mxu0
      %v1253 = vadd.f32 0.0, %v1252
      %v1254 = vpop.f32.mrf.mxu0
      %1255 = vdwg.mxu0
      %1256 = vst [vmem:[#allocation1] ss:$9 sm:$0xff] %v856
      %s1257 = scalar_lea.vmem [#allocation1], 1
      %1258 = vst [vmem:[%s1257] ss:$9 sm:$0xff] %v857
      %s1259 = scalar_lea.vmem [#allocation1], 2
      %1260 = vst [vmem:[%s1259] ss:$9 sm:$0xff] %v751
      %v1261 = vld [vmem:[#allocation1] sm:$0xff]
      %1263 = vrot.lane.b32.xlu0 %v1261, 64
      %v1264 = vpop.permute.xlu0 %1263
      %v1266 = vsel %vm1204, %v1189, 0
      %v1269 = vand.u32 %v1264, %v1211
      %1271 = vmatpush.bf16.msra.mxu0 0
      %1272 = vmatpush.bf16.msra.mxu0 0
      %1273 = vmatpush.bf16.msra.mxu0 0
      %1274 = vmatpush.bf16.msra.mxu0 0
      %1275 = vmatpush.bf16.msra.mxu0 0
      %1276 = vmatpush.bf16.msra.mxu0 0
      %1277 = vmatpush.bf16.msra.mxu0 0
      %1278 = vmatpush.bf16.msra.mxu0 %v1269
      %1279 = vmatmul.bf16.gmra.mxu0 %v1266
      %v1280 = vpop.f32.mrf.mxu0
      %v1281 = vadd.f32 0.0, %v1280
      %v1282 = vpop.f32.mrf.mxu0
      %1283 = vdwg.mxu0
      %1284 = vst [vmem:[#allocation1] ss:$9 sm:$0xff] %v895
      %s1285 = scalar_lea.vmem [#allocation1], 1
      %1286 = vst [vmem:[%s1285] ss:$9 sm:$0xff] %v896
      %s1287 = scalar_lea.vmem [#allocation1], 2
      %1288 = vst [vmem:[%s1287] ss:$9 sm:$0xff] %v756
      %v1289 = vld [vmem:[#allocation1] sm:$0xff]
      %1291 = vrot.lane.b32.xlu0 %v1289, 64
      %v1292 = vpop.permute.xlu0 %1291
      %v1294 = vsel %vm1204, %v1190, 0
      %v1297 = vand.u32 %v1292, %v1211
      %1299 = vmatpush.bf16.msra.mxu0 0
      %1300 = vmatpush.bf16.msra.mxu0 0
      %1301 = vmatpush.bf16.msra.mxu0 0
      %1302 = vmatpush.bf16.msra.mxu0 0
      %1303 = vmatpush.bf16.msra.mxu0 0
      %1304 = vmatpush.bf16.msra.mxu0 0
      %1305 = vmatpush.bf16.msra.mxu0 0
      %1306 = vmatpush.bf16.msra.mxu0 %v1297
      %1307 = vmatmul.bf16.gmra.mxu0 %v1294
      %v1308 = vpop.f32.mrf.mxu0
      %v1309 = vadd.f32 0.0, %v1308
      %v1310 = vpop.f32.mrf.mxu0
      %1311 = vdwg.mxu0
      %1312 = vst [vmem:[#allocation1] ss:$9 sm:$0xff] %v934
      %s1313 = scalar_lea.vmem [#allocation1], 1
      %1314 = vst [vmem:[%s1313] ss:$9 sm:$0xff] %v935
      %s1315 = scalar_lea.vmem [#allocation1], 2
      %1316 = vst [vmem:[%s1315] ss:$9 sm:$0xff] %v761
      %v1317 = vld [vmem:[#allocation1] sm:$0xff]
      %1319 = vrot.lane.b32.xlu0 %v1317, 64
      %v1320 = vpop.permute.xlu0 %1319
      %v1322 = vsel %vm1204, %v1191, 0
      %v1325 = vand.u32 %v1320, %v1211
      %1327 = vmatpush.bf16.msra.mxu0 0
      %1328 = vmatpush.bf16.msra.mxu0 0
      %1329 = vmatpush.bf16.msra.mxu0 0
      %1330 = vmatpush.bf16.msra.mxu0 0
      %1331 = vmatpush.bf16.msra.mxu0 0
      %1332 = vmatpush.bf16.msra.mxu0 0
      %1333 = vmatpush.bf16.msra.mxu0 0
      %1334 = vmatpush.bf16.msra.mxu0 %v1325
      %1335 = vmatmul.bf16.gmra.mxu0 %v1322
      %v1336 = vpop.f32.mrf.mxu0
      %v1337 = vadd.f32 0.0, %v1336
      %v1338 = vpop.f32.mrf.mxu0
      %1339 = vdwg.mxu0
      %1340 = vst [vmem:[#allocation1] ss:$9 sm:$0xff] %v973
      %s1341 = scalar_lea.vmem [#allocation1], 1
      %1342 = vst [vmem:[%s1341] ss:$9 sm:$0xff] %v974
      %s1343 = scalar_lea.vmem [#allocation1], 2
      %1344 = vst [vmem:[%s1343] ss:$9 sm:$0xff] %v766
      %v1345 = vld [vmem:[#allocation1] sm:$0xff]
      %1347 = vrot.lane.b32.xlu0 %v1345, 64
      %v1348 = vpop.permute.xlu0 %1347
      %v1350 = vsel %vm1204, %v1192, 0
      %v1353 = vand.u32 %v1348, %v1211
      %1355 = vmatpush.bf16.msra.mxu0 0
      %1356 = vmatpush.bf16.msra.mxu0 0
      %1357 = vmatpush.bf16.msra.mxu0 0
      %1358 = vmatpush.bf16.msra.mxu0 0
      %1359 = vmatpush.bf16.msra.mxu0 0
      %1360 = vmatpush.bf16.msra.mxu0 0
      %1361 = vmatpush.bf16.msra.mxu0 0
      %1362 = vmatpush.bf16.msra.mxu0 %v1353
      %1363 = vmatmul.bf16.gmra.mxu0 %v1350
      %v1364 = vpop.f32.mrf.mxu0
      %v1365 = vadd.f32 0.0, %v1364
      %v1366 = vpop.f32.mrf.mxu0
      %1367 = vdwg.mxu0
      %1368 = vst [vmem:[#allocation1] ss:$9 sm:$0xff] %v1012
      %s1369 = scalar_lea.vmem [#allocation1], 1
      %1370 = vst [vmem:[%s1369] ss:$9 sm:$0xff] %v1013
      %s1371 = scalar_lea.vmem [#allocation1], 2
      %1372 = vst [vmem:[%s1371] ss:$9 sm:$0xff] %v771
      %v1373 = vld [vmem:[#allocation1] sm:$0xff]
      %1375 = vrot.lane.b32.xlu0 %v1373, 64
      %v1376 = vpop.permute.xlu0 %1375
      %v1378 = vsel %vm1204, %v1193, 0
      %v1381 = vand.u32 %v1376, %v1211
      %1383 = vmatpush.bf16.msra.mxu0 0
      %1384 = vmatpush.bf16.msra.mxu0 0
      %1385 = vmatpush.bf16.msra.mxu0 0
      %1386 = vmatpush.bf16.msra.mxu0 0
      %1387 = vmatpush.bf16.msra.mxu0 0
      %1388 = vmatpush.bf16.msra.mxu0 0
      %1389 = vmatpush.bf16.msra.mxu0 0
      %1390 = vmatpush.bf16.msra.mxu0 %v1381
      %1391 = vmatmul.bf16.gmra.mxu0 %v1378
      %v1392 = vpop.f32.mrf.mxu0
      %v1393 = vadd.f32 0.0, %v1392
      %v1394 = vpop.f32.mrf.mxu0
      %1395 = vdwg.mxu0
      %1396 = vst [vmem:[#allocation1] ss:$9 sm:$0xff] %v1051
      %s1397 = scalar_lea.vmem [#allocation1], 1
      %1398 = vst [vmem:[%s1397] ss:$9 sm:$0xff] %v1052
      %s1399 = scalar_lea.vmem [#allocation1], 2
      %1400 = vst [vmem:[%s1399] ss:$9 sm:$0xff] %v776
      %v1401 = vld [vmem:[#allocation1] sm:$0xff]
      %1403 = vrot.lane.b32.xlu0 %v1401, 64
      %v1404 = vpop.permute.xlu0 %1403
      %v1406 = vsel %vm1204, %v1194, 0
      %v1409 = vand.u32 %v1404, %v1211
      %1411 = vmatpush.bf16.msra.mxu0 0
      %1412 = vmatpush.bf16.msra.mxu0 0
      %1413 = vmatpush.bf16.msra.mxu0 0
      %1414 = vmatpush.bf16.msra.mxu0 0
      %1415 = vmatpush.bf16.msra.mxu0 0
      %1416 = vmatpush.bf16.msra.mxu0 0
      %1417 = vmatpush.bf16.msra.mxu0 0
      %1418 = vmatpush.bf16.msra.mxu0 %v1409
      %1419 = vmatmul.bf16.gmra.mxu0 %v1406
      %v1420 = vpop.f32.mrf.mxu0
      %v1421 = vadd.f32 0.0, %v1420
      %v1422 = vpop.f32.mrf.mxu0
      %1423 = vdwg.mxu0
      %1424 = vst [vmem:[#allocation1] ss:$9 sm:$0xff] %v777
      %s1425 = scalar_lea.vmem [#allocation1], 1
      %1426 = vst [vmem:[%s1425] ss:$9 sm:$0xff] %v778
      %s1427 = scalar_lea.vmem [#allocation1], 2
      %1428 = vst [vmem:[%s1427] ss:$9 sm:$0xff] %v741
      %v1429 = vld [vmem:[#allocation1] sm:$0xff]
      %1431 = vrot.lane.b32.xlu0 %v1429, 112
      %v1432 = vpop.permute.xlu0 %1431
      %1433 = vst [vmem:[#allocation1] ss:$9 sm:$0xff] %v777
      %s1434 = scalar_lea.vmem [#allocation1], 1
      %1435 = vst [vmem:[%s1434] ss:$9 sm:$0xff] %v778
      %s1436 = scalar_lea.vmem [#allocation1], 2
      %1437 = vst [vmem:[%s1436] ss:$9 sm:$0xff] %v741
      %v1438 = vld [vmem:[#allocation1] sm:$0xff]
      %1440 = vrot.lane.b32.xlu0 %v1438, 80
      %v1441 = vpop.permute.xlu0 %1440
      %v1443 = vsel %vm798, %v1432, 0
      %v1446 = vsel %vm798, %v1441, 0
      %1448 = vmatpush.bf16.xpose.msra.mxu0 0
      %1449 = vmatpush.bf16.xpose.msra.mxu0 0
      %1450 = vmatpush.bf16.xpose.msra.mxu0 0
      %1451 = vmatpush.bf16.xpose.msra.mxu0 0
      %1452 = vmatpush.bf16.xpose.msra.mxu0 0
      %1453 = vmatpush.bf16.xpose.msra.mxu0 0
      %1454 = vmatpush.bf16.xpose.msra.mxu0 0
      %1455 = vmatpush.bf16.xpose.msra.mxu0 %v1446
      %1456 = vmatmul.bf16.gmra.mxu0 %v1443
      %v1457 = vpop.f32.mrf.mxu0
      %v1458 = vadd.f32 0.0, %v1457
      %v1459 = vpop.f32.mrf.mxu0
      %1460 = vdwg.mxu0
      %1461 = vst [vmem:[#allocation1] ss:$9 sm:$0xff] %v817
      %s1462 = scalar_lea.vmem [#allocation1], 1
      %1463 = vst [vmem:[%s1462] ss:$9 sm:$0xff] %v818
      %s1464 = scalar_lea.vmem [#allocation1], 2
      %1465 = vst [vmem:[%s1464] ss:$9 sm:$0xff] %v746
      %v1466 = vld [vmem:[#allocation1] sm:$0xff]
      %1468 = vrot.lane.b32.xlu0 %v1466, 112
      %v1469 = vpop.permute.xlu0 %1468
      %1470 = vst [vmem:[#allocation1] ss:$9 sm:$0xff] %v817
      %s1471 = scalar_lea.vmem [#allocation1], 1
      %1472 = vst [vmem:[%s1471] ss:$9 sm:$0xff] %v818
      %s1473 = scalar_lea.vmem [#allocation1], 2
      %1474 = vst [vmem:[%s1473] ss:$9 sm:$0xff] %v746
      %v1475 = vld [vmem:[#allocation1] sm:$0xff]
      %1477 = vrot.lane.b32.xlu0 %v1475, 80
      %v1478 = vpop.permute.xlu0 %1477
      %v1480 = vsel %vm798, %v1469, 0
      %v1483 = vsel %vm798, %v1478, 0
      %1485 = vmatpush.bf16.xpose.msra.mxu0 0
      %1486 = vmatpush.bf16.xpose.msra.mxu0 0
      %1487 = vmatpush.bf16.xpose.msra.mxu0 0
      %1488 = vmatpush.bf16.xpose.msra.mxu0 0
      %1489 = vmatpush.bf16.xpose.msra.mxu0 0
      %1490 = vmatpush.bf16.xpose.msra.mxu0 0
      %1491 = vmatpush.bf16.xpose.msra.mxu0 0
      %1492 = vmatpush.bf16.xpose.msra.mxu0 %v1483
      %1493 = vmatmul.bf16.gmra.mxu0 %v1480
      %v1494 = vpop.f32.mrf.mxu0
      %v1495 = vadd.f32 0.0, %v1494
      %v1496 = vpop.f32.mrf.mxu0
      %1497 = vdwg.mxu0
      %1498 = vst [vmem:[#allocation1] ss:$9 sm:$0xff] %v856
      %s1499 = scalar_lea.vmem [#allocation1], 1
      %1500 = vst [vmem:[%s1499] ss:$9 sm:$0xff] %v857
      %s1501 = scalar_lea.vmem [#allocation1], 2
      %1502 = vst [vmem:[%s1501] ss:$9 sm:$0xff] %v751
      %v1503 = vld [vmem:[#allocation1] sm:$0xff]
      %1505 = vrot.lane.b32.xlu0 %v1503, 112
      %v1506 = vpop.permute.xlu0 %1505
      %1507 = vst [vmem:[#allocation1] ss:$9 sm:$0xff] %v856
      %s1508 = scalar_lea.vmem [#allocation1], 1
      %1509 = vst [vmem:[%s1508] ss:$9 sm:$0xff] %v857
      %s1510 = scalar_lea.vmem [#allocation1], 2
      %1511 = vst [vmem:[%s1510] ss:$9 sm:$0xff] %v751
      %v1512 = vld [vmem:[#allocation1] sm:$0xff]
      %1514 = vrot.lane.b32.xlu0 %v1512, 80
      %v1515 = vpop.permute.xlu0 %1514
      %v1517 = vsel %vm798, %v1506, 0
      %v1520 = vsel %vm798, %v1515, 0
      %1522 = vmatpush.bf16.xpose.msra.mxu0 0
      %1523 = vmatpush.bf16.xpose.msra.mxu0 0
      %1524 = vmatpush.bf16.xpose.msra.mxu0 0
      %1525 = vmatpush.bf16.xpose.msra.mxu0 0
      %1526 = vmatpush.bf16.xpose.msra.mxu0 0
      %1527 = vmatpush.bf16.xpose.msra.mxu0 0
      %1528 = vmatpush.bf16.xpose.msra.mxu0 0
      %1529 = vmatpush.bf16.xpose.msra.mxu0 %v1520
      %1530 = vmatmul.bf16.gmra.mxu0 %v1517
      %v1531 = vpop.f32.mrf.mxu0
      %v1532 = vadd.f32 0.0, %v1531
      %v1533 = vpop.f32.mrf.mxu0
      %1534 = vdwg.mxu0
      %1535 = vst [vmem:[#allocation1] ss:$9 sm:$0xff] %v895
      %s1536 = scalar_lea.vmem [#allocation1], 1
      %1537 = vst [vmem:[%s1536] ss:$9 sm:$0xff] %v896
      %s1538 = scalar_lea.vmem [#allocation1], 2
      %1539 = vst [vmem:[%s1538] ss:$9 sm:$0xff] %v756
      %v1540 = vld [vmem:[#allocation1] sm:$0xff]
      %1542 = vrot.lane.b32.xlu0 %v1540, 112
      %v1543 = vpop.permute.xlu0 %1542
      %1544 = vst [vmem:[#allocation1] ss:$9 sm:$0xff] %v895
      %s1545 = scalar_lea.vmem [#allocation1], 1
      %1546 = vst [vmem:[%s1545] ss:$9 sm:$0xff] %v896
      %s1547 = scalar_lea.vmem [#allocation1], 2
      %1548 = vst [vmem:[%s1547] ss:$9 sm:$0xff] %v756
      %v1549 = vld [vmem:[#allocation1] sm:$0xff]
      %1551 = vrot.lane.b32.xlu0 %v1549, 80
      %v1552 = vpop.permute.xlu0 %1551
      %v1554 = vsel %vm798, %v1543, 0
      %v1557 = vsel %vm798, %v1552, 0
      %1559 = vmatpush.bf16.xpose.msra.mxu0 0
      %1560 = vmatpush.bf16.xpose.msra.mxu0 0
      %1561 = vmatpush.bf16.xpose.msra.mxu0 0
      %1562 = vmatpush.bf16.xpose.msra.mxu0 0
      %1563 = vmatpush.bf16.xpose.msra.mxu0 0
      %1564 = vmatpush.bf16.xpose.msra.mxu0 0
      %1565 = vmatpush.bf16.xpose.msra.mxu0 0
      %1566 = vmatpush.bf16.xpose.msra.mxu0 %v1557
      %1567 = vmatmul.bf16.gmra.mxu0 %v1554
      %v1568 = vpop.f32.mrf.mxu0
      %v1569 = vadd.f32 0.0, %v1568
      %v1570 = vpop.f32.mrf.mxu0
      %1571 = vdwg.mxu0
      %1572 = vst [vmem:[#allocation1] ss:$9 sm:$0xff] %v934
      %s1573 = scalar_lea.vmem [#allocation1], 1
      %1574 = vst [vmem:[%s1573] ss:$9 sm:$0xff] %v935
      %s1575 = scalar_lea.vmem [#allocation1], 2
      %1576 = vst [vmem:[%s1575] ss:$9 sm:$0xff] %v761
      %v1577 = vld [vmem:[#allocation1] sm:$0xff]
      %1579 = vrot.lane.b32.xlu0 %v1577, 112
      %v1580 = vpop.permute.xlu0 %1579
      %1581 = vst [vmem:[#allocation1] ss:$9 sm:$0xff] %v934
      %s1582 = scalar_lea.vmem [#allocation1], 1
      %1583 = vst [vmem:[%s1582] ss:$9 sm:$0xff] %v935
      %s1584 = scalar_lea.vmem [#allocation1], 2
      %1585 = vst [vmem:[%s1584] ss:$9 sm:$0xff] %v761
      %v1586 = vld [vmem:[#allocation1] sm:$0xff]
      %1588 = vrot.lane.b32.xlu0 %v1586, 80
      %v1589 = vpop.permute.xlu0 %1588
      %v1591 = vsel %vm798, %v1580, 0
      %v1594 = vsel %vm798, %v1589, 0
      %1596 = vmatpush.bf16.xpose.msra.mxu0 0
      %1597 = vmatpush.bf16.xpose.msra.mxu0 0
      %1598 = vmatpush.bf16.xpose.msra.mxu0 0
      %1599 = vmatpush.bf16.xpose.msra.mxu0 0
      %1600 = vmatpush.bf16.xpose.msra.mxu0 0
      %1601 = vmatpush.bf16.xpose.msra.mxu0 0
      %1602 = vmatpush.bf16.xpose.msra.mxu0 0
      %1603 = vmatpush.bf16.xpose.msra.mxu0 %v1594
      %1604 = vmatmul.bf16.gmra.mxu0 %v1591
      %v1605 = vpop.f32.mrf.mxu0
      %v1606 = vadd.f32 0.0, %v1605
      %v1607 = vpop.f32.mrf.mxu0
      %1608 = vdwg.mxu0
      %1609 = vst [vmem:[#allocation1] ss:$9 sm:$0xff] %v973
      %s1610 = scalar_lea.vmem [#allocation1], 1
      %1611 = vst [vmem:[%s1610] ss:$9 sm:$0xff] %v974
      %s1612 = scalar_lea.vmem [#allocation1], 2
      %1613 = vst [vmem:[%s1612] ss:$9 sm:$0xff] %v766
      %v1614 = vld [vmem:[#allocation1] sm:$0xff]
      %1616 = vrot.lane.b32.xlu0 %v1614, 112
      %v1617 = vpop.permute.xlu0 %1616
      %1618 = vst [vmem:[#allocation1] ss:$9 sm:$0xff] %v973
      %s1619 = scalar_lea.vmem [#allocation1], 1
      %1620 = vst [vmem:[%s1619] ss:$9 sm:$0xff] %v974
      %s1621 = scalar_lea.vmem [#allocation1], 2
      %1622 = vst [vmem:[%s1621] ss:$9 sm:$0xff] %v766
      %v1623 = vld [vmem:[#allocation1] sm:$0xff]
      %1625 = vrot.lane.b32.xlu0 %v1623, 80
      %v1626 = vpop.permute.xlu0 %1625
      %v1628 = vsel %vm798, %v1617, 0
      %v1631 = vsel %vm798, %v1626, 0
      %1633 = vmatpush.bf16.xpose.msra.mxu0 0
      %1634 = vmatpush.bf16.xpose.msra.mxu0 0
      %1635 = vmatpush.bf16.xpose.msra.mxu0 0
      %1636 = vmatpush.bf16.xpose.msra.mxu0 0
      %1637 = vmatpush.bf16.xpose.msra.mxu0 0
      %1638 = vmatpush.bf16.xpose.msra.mxu0 0
      %1639 = vmatpush.bf16.xpose.msra.mxu0 0
      %1640 = vmatpush.bf16.xpose.msra.mxu0 %v1631
      %1641 = vmatmul.bf16.gmra.mxu0 %v1628
      %v1642 = vpop.f32.mrf.mxu0
      %v1643 = vadd.f32 0.0, %v1642
      %v1644 = vpop.f32.mrf.mxu0
      %1645 = vdwg.mxu0
      %1646 = vst [vmem:[#allocation1] ss:$9 sm:$0xff] %v1012
      %s1647 = scalar_lea.vmem [#allocation1], 1
      %1648 = vst [vmem:[%s1647] ss:$9 sm:$0xff] %v1013
      %s1649 = scalar_lea.vmem [#allocation1], 2
      %1650 = vst [vmem:[%s1649] ss:$9 sm:$0xff] %v771
      %v1651 = vld [vmem:[#allocation1] sm:$0xff]
      %1653 = vrot.lane.b32.xlu0 %v1651, 112
      %v1654 = vpop.permute.xlu0 %1653
      %1655 = vst [vmem:[#allocation1] ss:$9 sm:$0xff] %v1012
      %s1656 = scalar_lea.vmem [#allocation1], 1
      %1657 = vst [vmem:[%s1656] ss:$9 sm:$0xff] %v1013
      %s1658 = scalar_lea.vmem [#allocation1], 2
      %1659 = vst [vmem:[%s1658] ss:$9 sm:$0xff] %v771
      %v1660 = vld [vmem:[#allocation1] sm:$0xff]
      %1662 = vrot.lane.b32.xlu0 %v1660, 80
      %v1663 = vpop.permute.xlu0 %1662
      %v1665 = vsel %vm798, %v1654, 0
      %v1668 = vsel %vm798, %v1663, 0
      %1670 = vmatpush.bf16.xpose.msra.mxu0 0
      %1671 = vmatpush.bf16.xpose.msra.mxu0 0
      %1672 = vmatpush.bf16.xpose.msra.mxu0 0
      %1673 = vmatpush.bf16.xpose.msra.mxu0 0
      %1674 = vmatpush.bf16.xpose.msra.mxu0 0
      %1675 = vmatpush.bf16.xpose.msra.mxu0 0
      %1676 = vmatpush.bf16.xpose.msra.mxu0 0
      %1677 = vmatpush.bf16.xpose.msra.mxu0 %v1668
      %1678 = vmatmul.bf16.gmra.mxu0 %v1665
      %v1679 = vpop.f32.mrf.mxu0
      %v1680 = vadd.f32 0.0, %v1679
      %v1681 = vpop.f32.mrf.mxu0
      %1682 = vdwg.mxu0
      %1683 = vst [vmem:[#allocation1] ss:$9 sm:$0xff] %v1051
      %s1684 = scalar_lea.vmem [#allocation1], 1
      %1685 = vst [vmem:[%s1684] ss:$9 sm:$0xff] %v1052
      %s1686 = scalar_lea.vmem [#allocation1], 2
      %1687 = vst [vmem:[%s1686] ss:$9 sm:$0xff] %v776
      %v1688 = vld [vmem:[#allocation1] sm:$0xff]
      %1690 = vrot.lane.b32.xlu0 %v1688, 112
      %v1691 = vpop.permute.xlu0 %1690
      %1692 = vst [vmem:[#allocation1] ss:$9 sm:$0xff] %v1051
      %s1693 = scalar_lea.vmem [#allocation1], 1
      %1694 = vst [vmem:[%s1693] ss:$9 sm:$0xff] %v1052
      %s1695 = scalar_lea.vmem [#allocation1], 2
      %1696 = vst [vmem:[%s1695] ss:$9 sm:$0xff] %v776
      %v1697 = vld [vmem:[#allocation1] sm:$0xff]
      %1699 = vrot.lane.b32.xlu0 %v1697, 80
      %v1700 = vpop.permute.xlu0 %1699
      %v1702 = vsel %vm798, %v1691, 0
      %v1705 = vsel %vm798, %v1700, 0
      %1707 = vmatpush.bf16.xpose.msra.mxu0 0
      %1708 = vmatpush.bf16.xpose.msra.mxu0 0
      %1709 = vmatpush.bf16.xpose.msra.mxu0 0
      %1710 = vmatpush.bf16.xpose.msra.mxu0 0
      %1711 = vmatpush.bf16.xpose.msra.mxu0 0
      %1712 = vmatpush.bf16.xpose.msra.mxu0 0
      %1713 = vmatpush.bf16.xpose.msra.mxu0 0
      %1714 = vmatpush.bf16.xpose.msra.mxu0 %v1705
      %1715 = vmatmul.bf16.gmra.mxu0 %v1702
      %v1716 = vpop.f32.mrf.mxu0
      %v1717 = vadd.f32 0.0, %v1716
      %v1718 = vpop.f32.mrf.mxu0
      %1719 = vdwg.mxu0
      %v1720 = vmul.f32 %v1458, 0.25
      %v1721 = vmul.f32 %v1495, 0.25
      %v1722 = vmul.f32 %v1532, 0.25
      %v1723 = vmul.f32 %v1569, 0.25
      %v1724 = vmul.f32 %v1606, 0.25
      %v1725 = vmul.f32 %v1643, 0.25
      %v1726 = vmul.f32 %v1680, 0.25
      %v1727 = vmul.f32 %v1717, 0.25
      %v1728 = vsel %vm1098, %v1720, -inf
      %1729 = vmax.xlane.f32.xlu0 %v1728
      %v1730 = vpop.xlane.xlu0 %1729
      %v1731 = vsel %vm1098, %v1721, -inf
      %1732 = vmax.xlane.f32.xlu0 %v1731
      %v1733 = vpop.xlane.xlu0 %1732
      %v1734 = vsel %vm1098, %v1722, -inf
      %1735 = vmax.xlane.f32.xlu0 %v1734
      %v1736 = vpop.xlane.xlu0 %1735
      %v1737 = vsel %vm1098, %v1723, -inf
      %1738 = vmax.xlane.f32.xlu0 %v1737
      %v1739 = vpop.xlane.xlu0 %1738
      %v1740 = vsel %vm1098, %v1724, -inf
      %1741 = vmax.xlane.f32.xlu0 %v1740
      %v1742 = vpop.xlane.xlu0 %1741
      %v1743 = vsel %vm1098, %v1725, -inf
      %1744 = vmax.xlane.f32.xlu0 %v1743
      %v1745 = vpop.xlane.xlu0 %1744
      %v1746 = vsel %vm1098, %v1726, -inf
      %1747 = vmax.xlane.f32.xlu0 %v1746
      %v1748 = vpop.xlane.xlu0 %1747
      %v1749 = vsel %vm1098, %v1727, -inf
      %1750 = vmax.xlane.f32.xlu0 %v1749
      %v1751 = vpop.xlane.xlu0 %1750
      %v1752 = vsub.f32 %v1720, %v1730
      %v1753 = vsub.f32 %v1721, %v1733
      %v1754 = vsub.f32 %v1722, %v1736
      %v1755 = vsub.f32 %v1723, %v1739
      %v1756 = vsub.f32 %v1724, %v1742
      %v1757 = vsub.f32 %v1725, %v1745
      %v1758 = vsub.f32 %v1726, %v1748
      %v1759 = vsub.f32 %v1727, %v1751
      %v1760 = vmul.f32 %v1752, 1.442695
      %v1761 = vpow.pop %v1760
      %v1762 = vmul.f32 %v1753, 1.442695
      %v1763 = vpow.pop %v1762
      %v1764 = vmul.f32 %v1754, 1.442695
      %v1765 = vpow.pop %v1764
      %v1766 = vmul.f32 %v1755, 1.442695
      %v1767 = vpow.pop %v1766
      %v1768 = vmul.f32 %v1756, 1.442695
      %v1769 = vpow.pop %v1768
      %v1770 = vmul.f32 %v1757, 1.442695
      %v1771 = vpow.pop %v1770
      %v1772 = vmul.f32 %v1758, 1.442695
      %v1773 = vpow.pop %v1772
      %v1774 = vmul.f32 %v1759, 1.442695
      %v1775 = vpow.pop %v1774
      %v1776 = vsel %vm1098, %v1761, 0.0
      %1777 = vadd.xlane.f32.xlu0 %v1776
      %v1778 = vpop.xlane.xlu0 %1777
      %v1779 = vsel %vm1098, %v1763, 0.0
      %1780 = vadd.xlane.f32.xlu0 %v1779
      %v1781 = vpop.xlane.xlu0 %1780
      %v1782 = vsel %vm1098, %v1765, 0.0
      %1783 = vadd.xlane.f32.xlu0 %v1782
      %v1784 = vpop.xlane.xlu0 %1783
      %v1785 = vsel %vm1098, %v1767, 0.0
      %1786 = vadd.xlane.f32.xlu0 %v1785
      %v1787 = vpop.xlane.xlu0 %1786
      %v1788 = vsel %vm1098, %v1769, 0.0
      %1789 = vadd.xlane.f32.xlu0 %v1788
      %v1790 = vpop.xlane.xlu0 %1789
      %v1791 = vsel %vm1098, %v1771, 0.0
      %1792 = vadd.xlane.f32.xlu0 %v1791
      %v1793 = vpop.xlane.xlu0 %1792
      %v1794 = vsel %vm1098, %v1773, 0.0
      %1795 = vadd.xlane.f32.xlu0 %v1794
      %v1796 = vpop.xlane.xlu0 %1795
      %v1797 = vsel %vm1098, %v1775, 0.0
      %1798 = vadd.xlane.f32.xlu0 %v1797
      %v1799 = vpop.xlane.xlu0 %1798
      %v1800 = vrcp.pop %v1778
      %v1801 = vrcp.pop %v1781
      %v1802 = vrcp.pop %v1784
      %v1803 = vrcp.pop %v1787
      %v1804 = vrcp.pop %v1790
      %v1805 = vrcp.pop %v1793
      %v1806 = vrcp.pop %v1796
      %v1807 = vrcp.pop %v1799
      %v1808 = vmul.f32 %v1761, %v1800
      %v1809 = vmul.f32 %v1763, %v1801
      %v1810 = vmul.f32 %v1765, %v1802
      %v1811 = vmul.f32 %v1767, %v1803
      %v1812 = vmul.f32 %v1769, %v1804
      %v1813 = vmul.f32 %v1771, %v1805
      %v1814 = vmul.f32 %v1773, %v1806
      %v1815 = vmul.f32 %v1775, %v1807
      %v1816 = vpack.c.bf16 %v1808, %v1808
      %v1817 = vpack.c.bf16 %v1809, %v1809
      %v1818 = vpack.c.bf16 %v1810, %v1810
      %v1819 = vpack.c.bf16 %v1811, %v1811
      %v1820 = vpack.c.bf16 %v1812, %v1812
      %v1821 = vpack.c.bf16 %v1813, %v1813
      %v1822 = vpack.c.bf16 %v1814, %v1814
      %v1823 = vpack.c.bf16 %v1815, %v1815
      %1824 = vst [vmem:[#allocation1] ss:$9 sm:$0xff] %v777
      %s1825 = scalar_lea.vmem [#allocation1], 1
      %1826 = vst [vmem:[%s1825] ss:$9 sm:$0xff] %v778
      %s1827 = scalar_lea.vmem [#allocation1], 2
      %1828 = vst [vmem:[%s1827] ss:$9 sm:$0xff] %v741
      %v1829 = vld [vmem:[#allocation1] sm:$0xff]
      %1831 = vrot.lane.b32.xlu0 %v1829, 48
      %v1832 = vpop.permute.xlu0 %1831
      %v1834 = vsel %vm1204, %v1816, 0
      %v1837 = vand.u32 %v1832, %v1211
      %1839 = vmatpush.bf16.msra.mxu0 0
      %1840 = vmatpush.bf16.msra.mxu0 0
      %1841 = vmatpush.bf16.msra.mxu0 0
      %1842 = vmatpush.bf16.msra.mxu0 0
      %1843 = vmatpush.bf16.msra.mxu0 0
      %1844 = vmatpush.bf16.msra.mxu0 0
      %1845 = vmatpush.bf16.msra.mxu0 0
      %1846 = vmatpush.bf16.msra.mxu0 %v1837
      %1847 = vmatmul.bf16.gmra.mxu0 %v1834
      %v1848 = vpop.f32.mrf.mxu0
      %v1849 = vadd.f32 0.0, %v1848
      %v1850 = vpop.f32.mrf.mxu0
      %1851 = vdwg.mxu0
      %1852 = vst [vmem:[#allocation1] ss:$9 sm:$0xff] %v817
      %s1853 = scalar_lea.vmem [#allocation1], 1
      %1854 = vst [vmem:[%s1853] ss:$9 sm:$0xff] %v818
      %s1855 = scalar_lea.vmem [#allocation1], 2
      %1856 = vst [vmem:[%s1855] ss:$9 sm:$0xff] %v746
      %v1857 = vld [vmem:[#allocation1] sm:$0xff]
      %1859 = vrot.lane.b32.xlu0 %v1857, 48
      %v1860 = vpop.permute.xlu0 %1859
      %v1862 = vsel %vm1204, %v1817, 0
      %v1865 = vand.u32 %v1860, %v1211
      %1867 = vmatpush.bf16.msra.mxu0 0
      %1868 = vmatpush.bf16.msra.mxu0 0
      %1869 = vmatpush.bf16.msra.mxu0 0
      %1870 = vmatpush.bf16.msra.mxu0 0
      %1871 = vmatpush.bf16.msra.mxu0 0
      %1872 = vmatpush.bf16.msra.mxu0 0
      %1873 = vmatpush.bf16.msra.mxu0 0
      %1874 = vmatpush.bf16.msra.mxu0 %v1865
      %1875 = vmatmul.bf16.gmra.mxu0 %v1862
      %v1876 = vpop.f32.mrf.mxu0
      %v1877 = vadd.f32 0.0, %v1876
      %v1878 = vpop.f32.mrf.mxu0
      %1879 = vdwg.mxu0
      %1880 = vst [vmem:[#allocation1] ss:$9 sm:$0xff] %v856
      %s1881 = scalar_lea.vmem [#allocation1], 1
      %1882 = vst [vmem:[%s1881] ss:$9 sm:$0xff] %v857
      %s1883 = scalar_lea.vmem [#allocation1], 2
      %1884 = vst [vmem:[%s1883] ss:$9 sm:$0xff] %v751
      %v1885 = vld [vmem:[#allocation1] sm:$0xff]
      %1887 = vrot.lane.b32.xlu0 %v1885, 48
      %v1888 = vpop.permute.xlu0 %1887
      %v1890 = vsel %vm1204, %v1818, 0
      %v1893 = vand.u32 %v1888, %v1211
      %1895 = vmatpush.bf16.msra.mxu0 0
      %1896 = vmatpush.bf16.msra.mxu0 0
      %1897 = vmatpush.bf16.msra.mxu0 0
      %1898 = vmatpush.bf16.msra.mxu0 0
      %1899 = vmatpush.bf16.msra.mxu0 0
      %1900 = vmatpush.bf16.msra.mxu0 0
      %1901 = vmatpush.bf16.msra.mxu0 0
      %1902 = vmatpush.bf16.msra.mxu0 %v1893
      %1903 = vmatmul.bf16.gmra.mxu0 %v1890
      %v1904 = vpop.f32.mrf.mxu0
      %v1905 = vadd.f32 0.0, %v1904
      %v1906 = vpop.f32.mrf.mxu0
      %1907 = vdwg.mxu0
      %1908 = vst [vmem:[#allocation1] ss:$9 sm:$0xff] %v895
      %s1909 = scalar_lea.vmem [#allocation1], 1
      %1910 = vst [vmem:[%s1909] ss:$9 sm:$0xff] %v896
      %s1911 = scalar_lea.vmem [#allocation1], 2
      %1912 = vst [vmem:[%s1911] ss:$9 sm:$0xff] %v756
      %v1913 = vld [vmem:[#allocation1] sm:$0xff]
      %1915 = vrot.lane.b32.xlu0 %v1913, 48
      %v1916 = vpop.permute.xlu0 %1915
      %v1918 = vsel %vm1204, %v1819, 0
      %v1921 = vand.u32 %v1916, %v1211
      %1923 = vmatpush.bf16.msra.mxu0 0
      %1924 = vmatpush.bf16.msra.mxu0 0
      %1925 = vmatpush.bf16.msra.mxu0 0
      %1926 = vmatpush.bf16.msra.mxu0 0
      %1927 = vmatpush.bf16.msra.mxu0 0
      %1928 = vmatpush.bf16.msra.mxu0 0
      %1929 = vmatpush.bf16.msra.mxu0 0
      %1930 = vmatpush.bf16.msra.mxu0 %v1921
      %1931 = vmatmul.bf16.gmra.mxu0 %v1918
      %v1932 = vpop.f32.mrf.mxu0
      %v1933 = vadd.f32 0.0, %v1932
      %v1934 = vpop.f32.mrf.mxu0
      %1935 = vdwg.mxu0
      %1936 = vst [vmem:[#allocation1] ss:$9 sm:$0xff] %v934
      %s1937 = scalar_lea.vmem [#allocation1], 1
      %1938 = vst [vmem:[%s1937] ss:$9 sm:$0xff] %v935
      %s1939 = scalar_lea.vmem [#allocation1], 2
      %1940 = vst [vmem:[%s1939] ss:$9 sm:$0xff] %v761
      %v1941 = vld [vmem:[#allocation1] sm:$0xff]
      %1943 = vrot.lane.b32.xlu0 %v1941, 48
      %v1944 = vpop.permute.xlu0 %1943
      %v1946 = vsel %vm1204, %v1820, 0
      %v1949 = vand.u32 %v1944, %v1211
      %1951 = vmatpush.bf16.msra.mxu0 0
      %1952 = vmatpush.bf16.msra.mxu0 0
      %1953 = vmatpush.bf16.msra.mxu0 0
      %1954 = vmatpush.bf16.msra.mxu0 0
      %1955 = vmatpush.bf16.msra.mxu0 0
      %1956 = vmatpush.bf16.msra.mxu0 0
      %1957 = vmatpush.bf16.msra.mxu0 0
      %1958 = vmatpush.bf16.msra.mxu0 %v1949
      %1959 = vmatmul.bf16.gmra.mxu0 %v1946
      %v1960 = vpop.f32.mrf.mxu0
      %v1961 = vadd.f32 0.0, %v1960
      %v1962 = vpop.f32.mrf.mxu0
      %1963 = vdwg.mxu0
      %1964 = vst [vmem:[#allocation1] ss:$9 sm:$0xff] %v973
      %s1965 = scalar_lea.vmem [#allocation1], 1
      %1966 = vst [vmem:[%s1965] ss:$9 sm:$0xff] %v974
      %s1967 = scalar_lea.vmem [#allocation1], 2
      %1968 = vst [vmem:[%s1967] ss:$9 sm:$0xff] %v766
      %v1969 = vld [vmem:[#allocation1] sm:$0xff]
      %1971 = vrot.lane.b32.xlu0 %v1969, 48
      %v1972 = vpop.permute.xlu0 %1971
      %v1974 = vsel %vm1204, %v1821, 0
      %v1977 = vand.u32 %v1972, %v1211
      %1979 = vmatpush.bf16.msra.mxu0 0
      %1980 = vmatpush.bf16.msra.mxu0 0
      %1981 = vmatpush.bf16.msra.mxu0 0
      %1982 = vmatpush.bf16.msra.mxu0 0
      %1983 = vmatpush.bf16.msra.mxu0 0
      %1984 = vmatpush.bf16.msra.mxu0 0
      %1985 = vmatpush.bf16.msra.mxu0 0
      %1986 = vmatpush.bf16.msra.mxu0 %v1977
      %1987 = vmatmul.bf16.gmra.mxu0 %v1974
      %v1988 = vpop.f32.mrf.mxu0
      %v1989 = vadd.f32 0.0, %v1988
      %v1990 = vpop.f32.mrf.mxu0
      %1991 = vdwg.mxu0
      %1992 = vst [vmem:[#allocation1] ss:$9 sm:$0xff] %v1012
      %s1993 = scalar_lea.vmem [#allocation1], 1
      %1994 = vst [vmem:[%s1993] ss:$9 sm:$0xff] %v1013
      %s1995 = scalar_lea.vmem [#allocation1], 2
      %1996 = vst [vmem:[%s1995] ss:$9 sm:$0xff] %v771
      %v1997 = vld [vmem:[#allocation1] sm:$0xff]
      %1999 = vrot.lane.b32.xlu0 %v1997, 48
      %v2000 = vpop.permute.xlu0 %1999
      %v2002 = vsel %vm1204, %v1822, 0
      %v2005 = vand.u32 %v2000, %v1211
      %2007 = vmatpush.bf16.msra.mxu0 0
      %2008 = vmatpush.bf16.msra.mxu0 0
      %2009 = vmatpush.bf16.msra.mxu0 0
      %2010 = vmatpush.bf16.msra.mxu0 0
      %2011 = vmatpush.bf16.msra.mxu0 0
      %2012 = vmatpush.bf16.msra.mxu0 0
      %2013 = vmatpush.bf16.msra.mxu0 0
      %2014 = vmatpush.bf16.msra.mxu0 %v2005
      %2015 = vmatmul.bf16.gmra.mxu0 %v2002
      %v2016 = vpop.f32.mrf.mxu0
      %v2017 = vadd.f32 0.0, %v2016
      %v2018 = vpop.f32.mrf.mxu0
      %2019 = vdwg.mxu0
      %2020 = vst [vmem:[#allocation1] ss:$9 sm:$0xff] %v1051
      %s2021 = scalar_lea.vmem [#allocation1], 1
      %2022 = vst [vmem:[%s2021] ss:$9 sm:$0xff] %v1052
      %s2023 = scalar_lea.vmem [#allocation1], 2
      %2024 = vst [vmem:[%s2023] ss:$9 sm:$0xff] %v776
      %v2025 = vld [vmem:[#allocation1] sm:$0xff]
      %2027 = vrot.lane.b32.xlu0 %v2025, 48
      %v2028 = vpop.permute.xlu0 %2027
      %v2030 = vsel %vm1204, %v1823, 0
      %v2033 = vand.u32 %v2028, %v1211
      %2035 = vmatpush.bf16.msra.mxu0 0
      %2036 = vmatpush.bf16.msra.mxu0 0
      %2037 = vmatpush.bf16.msra.mxu0 0
      %2038 = vmatpush.bf16.msra.mxu0 0
      %2039 = vmatpush.bf16.msra.mxu0 0
      %2040 = vmatpush.bf16.msra.mxu0 0
      %2041 = vmatpush.bf16.msra.mxu0 0
      %2042 = vmatpush.bf16.msra.mxu0 %v2033
      %2043 = vmatmul.bf16.gmra.mxu0 %v2030
      %v2044 = vpop.f32.mrf.mxu0
      %v2045 = vadd.f32 0.0, %v2044
      %v2046 = vpop.f32.mrf.mxu0
      %2047 = vdwg.mxu0
      %2056 = vrot.lane.b32.xlu0 %v1849, 16
      %v2057 = vpop.permute.xlu0 %2056
      %2058 = vrot.lane.b32.xlu0 %v1877, 16
      %v2059 = vpop.permute.xlu0 %2058
      %2060 = vrot.lane.b32.xlu0 %v1905, 16
      %v2061 = vpop.permute.xlu0 %2060
      %2062 = vrot.lane.b32.xlu0 %v1933, 16
      %v2063 = vpop.permute.xlu0 %2062
      %2064 = vrot.lane.b32.xlu0 %v1961, 16
      %v2065 = vpop.permute.xlu0 %2064
      %2066 = vrot.lane.b32.xlu0 %v1989, 16
      %v2067 = vpop.permute.xlu0 %2066
      %2068 = vrot.lane.b32.xlu0 %v2017, 16
      %v2069 = vpop.permute.xlu0 %2068
      %2070 = vrot.lane.b32.xlu0 %v2045, 16
      %v2071 = vpop.permute.xlu0 %2070
      %v2080 = vsel %vm798, %v1225, %v2057
      %v2081 = vsel %vm798, %v1253, %v2059
      %v2082 = vsel %vm798, %v1281, %v2061
      %v2083 = vsel %vm798, %v1309, %v2063
      %v2084 = vsel %vm798, %v1337, %v2065
      %v2085 = vsel %vm798, %v1365, %v2067
      %v2086 = vsel %vm798, %v1393, %v2069
      %v2087 = vsel %vm798, %v1421, %v2071
      %v2096 = vrot.slane %v2080, 1
      %v2097 = vrot.slane %v2080, 2
      %v2098 = vrot.slane %v2080, 3
      %v2099 = vrot.slane %v2080, 4
      %v2100 = vrot.slane %v2081, 1
      %v2101 = vrot.slane %v2081, 2
      %v2102 = vrot.slane %v2081, 3
      %v2103 = vrot.slane %v2081, 4
      %v2104 = vrot.slane %v2082, 1
      %v2105 = vrot.slane %v2082, 2
      %v2106 = vrot.slane %v2082, 3
      %v2107 = vrot.slane %v2082, 4
      %v2108 = vrot.slane %v2083, 1
      %v2109 = vrot.slane %v2083, 2
      %v2110 = vrot.slane %v2083, 3
      %v2111 = vrot.slane %v2083, 4
      %v2112 = vrot.slane %v2084, 1
      %v2113 = vrot.slane %v2084, 2
      %v2114 = vrot.slane %v2084, 3
      %v2115 = vrot.slane %v2084, 4
      %v2116 = vrot.slane %v2085, 1
      %v2117 = vrot.slane %v2085, 2
      %v2118 = vrot.slane %v2085, 3
      %v2119 = vrot.slane %v2085, 4
      %v2120 = vrot.slane %v2086, 1
      %v2121 = vrot.slane %v2086, 2
      %v2122 = vrot.slane %v2086, 3
      %v2123 = vrot.slane %v2086, 4
      %v2124 = vrot.slane %v2087, 1
      %v2125 = vrot.slane %v2087, 2
      %v2126 = vrot.slane %v2087, 3
      %v2127 = vrot.slane %v2087, 4
      %2128 = vst [vmem:[#allocation1] ss:$9 sm:$0xff] %v2080
      %s2129 = scalar_lea.vmem [#allocation1], 1
      %2130 = vst [vmem:[%s2129] ss:$9 sm:$0xff] %v2096
      %s2131 = scalar_lea.vmem [#allocation1], 2
      %2132 = vst [vmem:[%s2131] ss:$9 sm:$0xff] %v2097
      %s2133 = scalar_lea.vmem [#allocation1], 3
      %2134 = vst [vmem:[%s2133] ss:$9 sm:$0xff] %v2098
      %s2135 = scalar_lea.vmem [#allocation1], 4
      %2136 = vst [vmem:[%s2135] ss:$9 sm:$0xff] %v2099
      %s2137 = scalar_lea.vmem [#allocation1], 5
      %2138 = vst [vmem:[%s2137] ss:$9 sm:$0xff] %v2081
      %s2139 = scalar_lea.vmem [#allocation1], 6
      %2140 = vst [vmem:[%s2139] ss:$9 sm:$0xff] %v2100
      %s2141 = scalar_lea.vmem [#allocation1], 7
      %2142 = vst [vmem:[%s2141] ss:$9 sm:$0xff] %v2101
      %v2143 = vld [vmem:[#allocation1] sm:$0xff]
      %2144 = vst [vmem:[#allocation1] ss:$9 sm:$0xff] %v2102
      %2145 = vst [vmem:[%s2129] ss:$9 sm:$0xff] %v2103
      %2146 = vst [vmem:[%s2131] ss:$9 sm:$0xff] %v2082
      %2147 = vst [vmem:[%s2133] ss:$9 sm:$0xff] %v2104
      %2148 = vst [vmem:[%s2135] ss:$9 sm:$0xff] %v2105
      %2149 = vst [vmem:[%s2137] ss:$9 sm:$0xff] %v2106
      %2150 = vst [vmem:[%s2139] ss:$9 sm:$0xff] %v2107
      %2151 = vst [vmem:[%s2141] ss:$9 sm:$0xff] %v2083
      %v2152 = vld [vmem:[#allocation1] sm:$0xff]
      %2153 = vst [vmem:[#allocation1] ss:$9 sm:$0xff] %v2108
      %2154 = vst [vmem:[%s2129] ss:$9 sm:$0xff] %v2109
      %2155 = vst [vmem:[%s2131] ss:$9 sm:$0xff] %v2110
      %2156 = vst [vmem:[%s2133] ss:$9 sm:$0xff] %v2111
      %2157 = vst [vmem:[%s2135] ss:$9 sm:$0xff] %v2084
      %2158 = vst [vmem:[%s2137] ss:$9 sm:$0xff] %v2112
      %2159 = vst [vmem:[%s2139] ss:$9 sm:$0xff] %v2113
      %2160 = vst [vmem:[%s2141] ss:$9 sm:$0xff] %v2114
      %v2161 = vld [vmem:[#allocation1] sm:$0xff]
      %2162 = vst [vmem:[#allocation1] ss:$9 sm:$0xff] %v2115
      %2163 = vst [vmem:[%s2129] ss:$9 sm:$0xff] %v2085
      %2164 = vst [vmem:[%s2131] ss:$9 sm:$0xff] %v2116
      %2165 = vst [vmem:[%s2133] ss:$9 sm:$0xff] %v2117
      %2166 = vst [vmem:[%s2135] ss:$9 sm:$0xff] %v2118
      %2167 = vst [vmem:[%s2137] ss:$9 sm:$0xff] %v2119
      %2168 = vst [vmem:[%s2139] ss:$9 sm:$0xff] %v2086
      %2169 = vst [vmem:[%s2141] ss:$9 sm:$0xff] %v2120
      %v2170 = vld [vmem:[#allocation1] sm:$0xff]
      %2171 = vst [vmem:[#allocation1] ss:$9 sm:$0xff] %v2121
      %2172 = vst [vmem:[%s2129] ss:$9 sm:$0xff] %v2122
      %2173 = vst [vmem:[%s2131] ss:$9 sm:$0xff] %v2123
      %2174 = vst [vmem:[%s2133] ss:$9 sm:$0xff] %v2087
      %2175 = vst [vmem:[%s2135] ss:$9 sm:$0xff] %v2124
      %2176 = vst [vmem:[%s2137] ss:$9 sm:$0xff] %v2125
      %2177 = vst [vmem:[%s2139] ss:$9 sm:$0xff] %v2126
      %2178 = vst [vmem:[%s2141] ss:$9 sm:$0xff] %v2127
      %v2179 = vld [vmem:[#allocation1] sm:$0xff]
      %v2185 = vpack.c.bf16 %v2152, %v2143
      %v2186 = vpack.c.bf16 %v2170, %v2161
      %v2187 = vpack.c.bf16 %v2179, %v2179
      %v2188 = vld [vmem:[%s564] sm:$0xf]
      %v2189 = vld [vmem:[%s564 + $0x4] sm:$0xf]
      %v2190 = vld [vmem:[%s564 + $0x8] sm:$0xf]
      %v2191 = vld [vmem:[%s564 + $0xc] sm:$0xf]
      %v2192 = vld [vmem:[%s567] sm:$0x1]
      %v2194 = vperm.slane %v2192, 0
      %v2200 = vunpack.c.l.b16 %v2188
      %v2201 = vunpack.c.l.b16 %v2189
      %v2202 = vunpack.c.l.b16 %v2190
      %v2203 = vunpack.c.l.b16 %v2191
      %v2204 = vpack.c.b16 %v2201, %v2200
      %v2205 = vpack.c.b16 %v2203, %v2202
      %v2209 = vsel %vm620, %v2185, 0
      %v2212 = vsel %vm620, %v2186, 0
      %v2215 = vsel %vm620, %v2187, 0
      %2217 = vmatpush.bf16.msra.mxu0 0
      %2218 = vmatpush.bf16.msra.mxu0 0
      %2219 = vmatpush.bf16.msra.mxu0 0
      %2220 = vmatpush.bf16.msra.mxu0 0
      %2221 = vmatpush.bf16.msra.mxu0 0
      %2222 = vmatpush.bf16.msra.mxu0 0
      %2223 = vmatpush.bf16.msra.mxu0 %v2205
      %2224 = vmatpush.bf16.msra.mxu0 %v2204
      %2225 = vmatmul.bf16.gmra.mxu0 %v2209
      %v2226 = vpop.f32.mrf.mxu0
      %v2227 = vadd.f32 %v2194, %v2226
      %v2228 = vpop.f32.mrf.mxu0
      %v2229 = vadd.f32 %v2194, %v2228
      %2230 = vmatmul.bf16.gmra.mxu0 %v2212
      %v2231 = vpop.f32.mrf.mxu0
      %v2232 = vadd.f32 %v2194, %v2231
      %v2233 = vpop.f32.mrf.mxu0
      %v2234 = vadd.f32 %v2194, %v2233
      %2235 = vmatmul.bf16.gmra.mxu0 %v2215
      %v2236 = vpop.f32.mrf.mxu0
      %v2237 = vadd.f32 %v2194, %v2236
      %v2238 = vpop.f32.mrf.mxu0
      %2239 = vdwg.mxu0
      %v2240 = vadd.f32 %v592, %v2227
      %v2241 = vadd.f32 %v593, %v2229
      %v2242 = vadd.f32 %v594, %v2232
      %v2243 = vadd.f32 %v595, %v2234
      %v2244 = vadd.f32 %v596, %v2237
      %v2245 = vmul.f32 %v2240, 0.999995
      %v2246 = vmul.f32 %v2241, 0.999995
      %v2247 = vmul.f32 %v2242, 0.999995
      %v2248 = vmul.f32 %v2243, 0.999995
      %v2249 = vmul.f32 %v2244, 0.999995
      %v2250 = vpack.c.bf16 %v2246, %v2245
      %v2251 = vpack.c.bf16 %v2248, %v2247
      %v2252 = vpack.c.bf16 %v2249, %v2249
      %v2253 = vld [vmem:[%s572] sm:$0xf]
      %v2254 = vld [vmem:[%s572 + $0x4] sm:$0xf]
      %v2255 = vld [vmem:[%s572 + $0x8] sm:$0xf]
      %v2256 = vld [vmem:[%s572 + $0xc] sm:$0xf]
      %v2257 = vld [vmem:[%s575] sm:$0x1]
      %v2259 = vperm.slane %v2257, 0
      %v2265 = vunpack.c.l.b16 %v2253
      %v2266 = vunpack.c.l.b16 %v2254
      %v2267 = vunpack.c.l.b16 %v2255
      %v2268 = vunpack.c.l.b16 %v2256
      %v2269 = vpack.c.b16 %v2266, %v2265
      %v2270 = vpack.c.b16 %v2268, %v2267
      %v2274 = vsel %vm620, %v2250, 0
      %v2277 = vsel %vm620, %v2251, 0
      %v2280 = vsel %vm620, %v2252, 0
      %2282 = vmatpush.bf16.msra.mxu0 0
      %2283 = vmatpush.bf16.msra.mxu0 0
      %2284 = vmatpush.bf16.msra.mxu0 0
      %2285 = vmatpush.bf16.msra.mxu0 0
      %2286 = vmatpush.bf16.msra.mxu0 0
      %2287 = vmatpush.bf16.msra.mxu0 0
      %2288 = vmatpush.bf16.msra.mxu0 %v2270
      %2289 = vmatpush.bf16.msra.mxu0 %v2269
      %2290 = vmatmul.bf16.gmra.mxu0 %v2274
      %v2291 = vpop.f32.mrf.mxu0
      %v2292 = vadd.f32 %v2259, %v2291
      %v2293 = vpop.f32.mrf.mxu0
      %v2294 = vadd.f32 %v2259, %v2293
      %2295 = vmatmul.bf16.gmra.mxu0 %v2277
      %v2296 = vpop.f32.mrf.mxu0
      %v2297 = vadd.f32 %v2259, %v2296
      %v2298 = vpop.f32.mrf.mxu0
      %v2299 = vadd.f32 %v2259, %v2298
      %2300 = vmatmul.bf16.gmra.mxu0 %v2280
      %v2301 = vpop.f32.mrf.mxu0
      %v2302 = vadd.f32 %v2259, %v2301
      %v2303 = vpop.f32.mrf.mxu0
      %2304 = vdwg.mxu0
      %v2305 = vmul.f32 %v2292, 0.5
      %v2306 = vmul.f32 %v2294, 0.5
      %v2307 = vmul.f32 %v2297, 0.5
      %v2308 = vmul.f32 %v2299, 0.5
      %v2309 = vmul.f32 %v2302, 0.5
      %v2310 = vmul.f32 %v2292, 0.044715
      %v2311 = vmul.f32 %v2294, 0.044715
      %v2312 = vmul.f32 %v2297, 0.044715
      %v2313 = vmul.f32 %v2299, 0.044715
      %v2314 = vmul.f32 %v2302, 0.044715
      %v2315 = vmul.f32 %v2310, %v2292
      %v2316 = vmul.f32 %v2311, %v2294
      %v2317 = vmul.f32 %v2312, %v2297
      %v2318 = vmul.f32 %v2313, %v2299
      %v2319 = vmul.f32 %v2314, %v2302
      %v2320 = vmul.f32 %v2315, %v2292
      %v2321 = vmul.f32 %v2316, %v2294
      %v2322 = vmul.f32 %v2317, %v2297
      %v2323 = vmul.f32 %v2318, %v2299
      %v2324 = vmul.f32 %v2319, %v2302
      %v2325 = vadd.f32 %v2292, %v2320
      %v2326 = vadd.f32 %v2294, %v2321
      %v2327 = vadd.f32 %v2297, %v2322
      %v2328 = vadd.f32 %v2299, %v2323
      %v2329 = vadd.f32 %v2302, %v2324
      %v2330 = vmul.f32 %v2325, 0.7978846
      %v2331 = vmul.f32 %v2326, 0.7978846
      %v2332 = vmul.f32 %v2327, 0.7978846
      %v2333 = vmul.f32 %v2328, 0.7978846
      %v2334 = vmul.f32 %v2329, 0.7978846
      %v2335 = vtanh.pop %v2330
      %v2336 = vtanh.pop %v2331
      %v2337 = vtanh.pop %v2332
      %v2338 = vtanh.pop %v2333
      %v2339 = vtanh.pop %v2334
      %v2340 = vadd.f32 %v2335, 1.0
      %v2341 = vadd.f32 %v2336, 1.0
      %v2342 = vadd.f32 %v2337, 1.0
      %v2343 = vadd.f32 %v2338, 1.0
      %v2344 = vadd.f32 %v2339, 1.0
      %v2345 = vmul.f32 %v2305, %v2340
      %v2346 = vmul.f32 %v2306, %v2341
      %v2347 = vmul.f32 %v2307, %v2342
      %v2348 = vmul.f32 %v2308, %v2343
      %v2349 = vmul.f32 %v2309, %v2344
      %v2350 = vpack.c.bf16 %v2346, %v2345
      %v2351 = vpack.c.bf16 %v2348, %v2347
      %v2352 = vpack.c.bf16 %v2349, %v2349
      %v2353 = vld [vmem:[%s580] sm:$0xf]
      %v2354 = vld [vmem:[%s580 + $0x4] sm:$0xf]
      %v2355 = vld [vmem:[%s580 + $0x8] sm:$0xf]
      %v2356 = vld [vmem:[%s580 + $0xc] sm:$0xf]
      %v2357 = vld [vmem:[%s583] sm:$0x1]
      %v2359 = vperm.slane %v2357, 0
      %v2365 = vunpack.c.l.b16 %v2353
      %v2366 = vunpack.c.l.b16 %v2354
      %v2367 = vunpack.c.l.b16 %v2355
      %v2368 = vunpack.c.l.b16 %v2356
      %v2369 = vpack.c.b16 %v2366, %v2365
      %v2370 = vpack.c.b16 %v2368, %v2367
      %v2374 = vsel %vm620, %v2350, 0
      %v2377 = vsel %vm620, %v2351, 0
      %v2380 = vsel %vm620, %v2352, 0
      %2382 = vmatpush.bf16.msra.mxu0 0
      %2383 = vmatpush.bf16.msra.mxu0 0
      %2384 = vmatpush.bf16.msra.mxu0 0
      %2385 = vmatpush.bf16.msra.mxu0 0
      %2386 = vmatpush.bf16.msra.mxu0 0
      %2387 = vmatpush.bf16.msra.mxu0 0
      %2388 = vmatpush.bf16.msra.mxu0 %v2370
      %2389 = vmatpush.bf16.msra.mxu0 %v2369
      %2390 = vmatmul.bf16.gmra.mxu0 %v2374
      %v2391 = vpop.f32.mrf.mxu0
      %v2392 = vadd.f32 %v2359, %v2391
      %v2393 = vpop.f32.mrf.mxu0
      %v2394 = vadd.f32 %v2359, %v2393
      %2395 = vmatmul.bf16.gmra.mxu0 %v2377
      %v2396 = vpop.f32.mrf.mxu0
      %v2397 = vadd.f32 %v2359, %v2396
      %v2398 = vpop.f32.mrf.mxu0
      %v2399 = vadd.f32 %v2359, %v2398
      %2400 = vmatmul.bf16.gmra.mxu0 %v2380
      %v2401 = vpop.f32.mrf.mxu0
      %v2402 = vadd.f32 %v2359, %v2401
      %v2403 = vpop.f32.mrf.mxu0
      %2404 = vdwg.mxu0
      %v2405 = vadd.f32 %v2245, %v2392
      %v2406 = vadd.f32 %v2246, %v2394
      %v2407 = vadd.f32 %v2247, %v2397
      %v2408 = vadd.f32 %v2248, %v2399
      %v2409 = vadd.f32 %v2249, %v2402
      %v2410 = vmul.f32 %v2405, 0.999995
      %v2411 = vmul.f32 %v2406, 0.999995
      %v2412 = vmul.f32 %v2407, 0.999995
      %v2413 = vmul.f32 %v2408, 0.999995
      %v2414 = vmul.f32 %v2409, 0.999995
      %v2415 = vpack.c.bf16 %v2410, %v2410
      %v2416 = vpack.c.bf16 %v2411, %v2411
      %v2417 = vpack.c.bf16 %v2412, %v2412
      %v2418 = vpack.c.bf16 %v2413, %v2413
      %v2419 = vpack.c.bf16 %v2414, %v2414
      %v2425 = vrot.slane %v2415, 3
      %v2426 = vrot.slane %v2416, 3
      %v2427 = vrot.slane %v2417, 3
      %v2428 = vrot.slane %v2418, 3
      %v2429 = vrot.slane %v2419, 3
      %v2432 = vsel %vm668, %v2415, %v2425
      %v2434 = vsel %vm673, %v2415, %v2425
      %v2436 = vrot.slane %v2434, 1
      %v2437 = vsel %vm677, %v2415, %v2425
      %v2439 = vrot.slane %v2437, 2
      %v2440 = vsel %vm681, %v2415, %v2425
      %v2442 = vrot.slane %v2440, 3
      %v2445 = vsel %vm668, %v2416, %v2426
      %v2447 = vsel %vm673, %v2416, %v2426
      %v2449 = vrot.slane %v2447, 1
      %v2450 = vsel %vm677, %v2416, %v2426
      %v2452 = vrot.slane %v2450, 2
      %v2453 = vsel %vm681, %v2416, %v2426
      %v2455 = vrot.slane %v2453, 3
      %v2458 = vsel %vm668, %v2417, %v2427
      %v2460 = vsel %vm673, %v2417, %v2427
      %v2462 = vrot.slane %v2460, 1
      %v2463 = vsel %vm677, %v2417, %v2427
      %v2465 = vrot.slane %v2463, 2
      %v2466 = vsel %vm681, %v2417, %v2427
      %v2468 = vrot.slane %v2466, 3
      %v2471 = vsel %vm668, %v2418, %v2428
      %v2473 = vsel %vm673, %v2418, %v2428
      %v2475 = vrot.slane %v2473, 1
      %v2476 = vsel %vm677, %v2418, %v2428
      %v2478 = vrot.slane %v2476, 2
      %v2479 = vsel %vm681, %v2418, %v2428
      %v2481 = vrot.slane %v2479, 3
      %v2484 = vsel %vm668, %v2419, %v2429
      %v2486 = vsel %vm673, %v2419, %v2429
      %v2488 = vrot.slane %v2486, 1
      %v2489 = vsel %vm677, %v2419, %v2429
      %v2491 = vrot.slane %v2489, 2
      %v2492 = vsel %vm681, %v2419, %v2429
      %v2494 = vrot.slane %v2492, 3
      %v2495 = vunpack.i.l.s16 %v2432
      %v2496 = vunpack.i.h.s16 %v2432
      %v2497 = vunpack.i.l.s16 %v2436
      %v2498 = vunpack.i.h.s16 %v2436
      %v2499 = vunpack.i.l.s16 %v2439
      %v2500 = vunpack.i.h.s16 %v2439
      %v2501 = vunpack.i.l.s16 %v2442
      %v2502 = vunpack.i.h.s16 %v2442
      %v2503 = vunpack.i.l.s16 %v2445
      %v2504 = vunpack.i.h.s16 %v2445
      %v2505 = vunpack.i.l.s16 %v2449
      %v2506 = vunpack.i.h.s16 %v2449
      %v2507 = vunpack.i.l.s16 %v2452
      %v2508 = vunpack.i.h.s16 %v2452
      %v2509 = vunpack.i.l.s16 %v2455
      %v2510 = vunpack.i.h.s16 %v2455
      %v2511 = vunpack.i.l.s16 %v2458
      %v2512 = vunpack.i.h.s16 %v2458
      %v2513 = vunpack.i.l.s16 %v2462
      %v2514 = vunpack.i.h.s16 %v2462
      %v2515 = vunpack.i.l.s16 %v2465
      %v2516 = vunpack.i.h.s16 %v2465
      %v2517 = vunpack.i.l.s16 %v2468
      %v2518 = vunpack.i.h.s16 %v2468
      %v2519 = vunpack.i.l.s16 %v2471
      %v2520 = vunpack.i.h.s16 %v2471
      %v2521 = vunpack.i.l.s16 %v2475
      %v2522 = vunpack.i.h.s16 %v2475
      %v2523 = vunpack.i.l.s16 %v2478
      %v2524 = vunpack.i.h.s16 %v2478
      %v2525 = vunpack.i.l.s16 %v2481
      %v2526 = vunpack.i.h.s16 %v2481
      %v2527 = vunpack.i.l.s16 %v2484
      %v2528 = vunpack.i.h.s16 %v2484
      %v2529 = vunpack.i.l.s16 %v2488
      %v2530 = vunpack.i.h.s16 %v2488
      %v2531 = vunpack.i.l.s16 %v2491
      %v2532 = vunpack.i.h.s16 %v2491
      %v2533 = vunpack.i.l.s16 %v2494
      %v2534 = vunpack.i.h.s16 %v2494
      %v2535 = vpack.i.b16 %v2500, %v2495
      %v2536 = vpack.i.b16 %v2510, %v2505
      %v2537 = vpack.i.b16 %v2520, %v2515
      %v2538 = vpack.i.b16 %v2530, %v2525
      %2540 = vst [vmem:[#allocation1] ss:$9 sm:$0xff] %v2535
      %s2542 = scalar_lea.vmem [#allocation1], 1
      %2543 = vst [vmem:[%s2542] ss:$9 sm:$0xff] %v2536
      %s2545 = scalar_lea.vmem [#allocation1], 2
      %2546 = vst [vmem:[%s2545] ss:$9 sm:$0xff] %v2537
      %s2548 = scalar_lea.vmem [#allocation1], 3
      %2549 = vst [vmem:[%s2548] ss:$9 sm:$0xff] %v2538
      %v2550 = vld [vmem:[#allocation1] sm:$0xff]
      %v2551 = vpack.i.b16 %v2501, %v2496
      %v2552 = vpack.i.b16 %v2511, %v2506
      %v2553 = vpack.i.b16 %v2521, %v2516
      %v2554 = vpack.i.b16 %v2531, %v2526
      %2556 = vst [vmem:[#allocation1] ss:$9 sm:$0xff] %v2551
      %s2558 = scalar_lea.vmem [#allocation1], 1
      %2559 = vst [vmem:[%s2558] ss:$9 sm:$0xff] %v2552
      %s2561 = scalar_lea.vmem [#allocation1], 2
      %2562 = vst [vmem:[%s2561] ss:$9 sm:$0xff] %v2553
      %s2564 = scalar_lea.vmem [#allocation1], 3
      %2565 = vst [vmem:[%s2564] ss:$9 sm:$0xff] %v2554
      %v2566 = vld [vmem:[#allocation1] sm:$0xff]
      %2568 = vrot.lane.b32.xlu0 %v2566, 32
      %v2569 = vpop.permute.xlu0 %2568
      %v2570 = vpack.i.b16 %v2502, %v2497
      %v2571 = vpack.i.b16 %v2512, %v2507
      %v2572 = vpack.i.b16 %v2522, %v2517
      %v2573 = vpack.i.b16 %v2532, %v2527
      %2575 = vst [vmem:[#allocation1] ss:$9 sm:$0xff] %v2570
      %s2577 = scalar_lea.vmem [#allocation1], 1
      %2578 = vst [vmem:[%s2577] ss:$9 sm:$0xff] %v2571
      %s2580 = scalar_lea.vmem [#allocation1], 2
      %2581 = vst [vmem:[%s2580] ss:$9 sm:$0xff] %v2572
      %s2583 = scalar_lea.vmem [#allocation1], 3
      %2584 = vst [vmem:[%s2583] ss:$9 sm:$0xff] %v2573
      %v2585 = vld [vmem:[#allocation1] sm:$0xff]
      %2587 = vrot.lane.b32.xlu0 %v2585, 64
      %v2588 = vpop.permute.xlu0 %2587
      %v2589 = vpack.i.b16 %v2503, %v2498
      %v2590 = vpack.i.b16 %v2513, %v2508
      %v2591 = vpack.i.b16 %v2523, %v2518
      %v2592 = vpack.i.b16 %v2533, %v2528
      %2594 = vst [vmem:[#allocation1] ss:$9 sm:$0xff] %v2589
      %s2596 = scalar_lea.vmem [#allocation1], 1
      %2597 = vst [vmem:[%s2596] ss:$9 sm:$0xff] %v2590
      %s2599 = scalar_lea.vmem [#allocation1], 2
      %2600 = vst [vmem:[%s2599] ss:$9 sm:$0xff] %v2591
      %s2602 = scalar_lea.vmem [#allocation1], 3
      %2603 = vst [vmem:[%s2602] ss:$9 sm:$0xff] %v2592
      %v2604 = vld [vmem:[#allocation1] sm:$0xff]
      %2606 = vrot.lane.b32.xlu0 %v2604, 96
      %v2607 = vpop.permute.xlu0 %2606
      %v2608 = vpack.i.b16 %v2504, %v2499
      %v2609 = vpack.i.b16 %v2514, %v2509
      %v2610 = vpack.i.b16 %v2524, %v2519
      %v2611 = vpack.i.b16 %v2534, %v2529
      %2613 = vst [vmem:[#allocation1] ss:$9 sm:$0xff] %v2608
      %s2615 = scalar_lea.vmem [#allocation1], 1
      %2616 = vst [vmem:[%s2615] ss:$9 sm:$0xff] %v2609
      %s2618 = scalar_lea.vmem [#allocation1], 2
      %2619 = vst [vmem:[%s2618] ss:$9 sm:$0xff] %v2610
      %s2621 = scalar_lea.vmem [#allocation1], 3
      %2622 = vst [vmem:[%s2621] ss:$9 sm:$0xff] %v2611
      %v2623 = vld [vmem:[#allocation1] sm:$0xff]
      %v2625 = vsel %vm620, %v2550, %v2569
      %vm2626 = vcmask 523264
      %v2628 = vsel %vm2626, %v2625, %v2588
      %vm2629 = vcmask 785408
      %v2631 = vsel %vm2629, %v2628, %v2607
      %v2633 = vld [vmem:[%s548] sm:$0xf]
      %v2634 = vld [vmem:[%s548 + $0x4] sm:$0xf]
      %v2635 = vld [vmem:[%s548 + $0x8] sm:$0xf]
      %v2636 = vld [vmem:[%s548 + $0xc] sm:$0xf]
      %v2637 = vld [vmem:[%s548 + $0x10] sm:$0xf]
      %v2638 = vld [vmem:[%s548 + $0x14] sm:$0xf]
      %v2639 = vld [vmem:[%s548 + $0x18] sm:$0xf]
      %v2640 = vld [vmem:[%s548 + $0x1c] sm:$0xf]
      %v2641 = vld [vmem:[%s548 + $0x20] sm:$0xf]
      %v2642 = vld [vmem:[%s548 + $0x24] sm:$0xf]
      %v2643 = vld [vmem:[%s548 + $0x28] sm:$0xf]
      %v2644 = vld [vmem:[%s548 + $0x2c] sm:$0xf]
      %v2645 = vld [vmem:[%s548 + $0x30] sm:$0xf]
      %v2646 = vld [vmem:[%s548 + $0x34] sm:$0xf]
      %v2647 = vld [vmem:[%s548 + $0x38] sm:$0xf]
      %v2648 = vld [vmem:[%s548 + $0x3c] sm:$0xf]
      %v2649 = vld [vmem:[%s548 + $0x40] sm:$0xf]
      %v2650 = vld [vmem:[%s548 + $0x44] sm:$0xf]
      %v2651 = vld [vmem:[%s548 + $0x48] sm:$0xf]
      %v2652 = vld [vmem:[%s548 + $0x4c] sm:$0xf]
      %v2653 = vld [vmem:[%s551] sm:$0x1]
      %v2655 = vperm.slane %v2653, 0
      %v2677 = vunpack.c.l.b16 %v2633
      %v2678 = vunpack.c.l.b16 %v2634
      %v2679 = vunpack.c.l.b16 %v2635
      %v2680 = vunpack.c.l.b16 %v2636
      %v2681 = vunpack.c.l.b16 %v2637
      %v2682 = vunpack.c.l.b16 %v2638
      %v2683 = vunpack.c.l.b16 %v2639
      %v2684 = vunpack.c.l.b16 %v2640
      %v2685 = vunpack.c.l.b16 %v2641
      %v2686 = vunpack.c.l.b16 %v2642
      %v2687 = vunpack.c.l.b16 %v2643
      %v2688 = vunpack.c.l.b16 %v2644
      %v2689 = vunpack.c.l.b16 %v2645
      %v2690 = vunpack.c.l.b16 %v2646
      %v2691 = vunpack.c.l.b16 %v2647
      %v2692 = vunpack.c.l.b16 %v2648
      %v2693 = vunpack.c.l.b16 %v2649
      %v2694 = vunpack.c.l.b16 %v2650
      %v2695 = vunpack.c.l.b16 %v2651
      %v2696 = vunpack.c.l.b16 %v2652
      %v2697 = vpack.c.b16 %v2678, %v2677
      %v2698 = vpack.c.b16 %v2680, %v2679
      %v2699 = vpack.c.b16 %v2682, %v2681
      %v2700 = vpack.c.b16 %v2684, %v2683
      %v2701 = vpack.c.b16 %v2686, %v2685
      %v2702 = vpack.c.b16 %v2688, %v2687
      %v2703 = vpack.c.b16 %v2690, %v2689
      %v2704 = vpack.c.b16 %v2692, %v2691
      %v2705 = vpack.c.b16 %v2694, %v2693
      %v2706 = vpack.c.b16 %v2696, %v2695
      %v2717 = vsel %vm620, %v2623, 0
      %2719 = vmatpush.bf16.msra.mxu0 %v2704
      %2720 = vmatpush.bf16.msra.mxu0 %v2703
      %2721 = vmatpush.bf16.msra.mxu0 %v2702
      %2722 = vmatpush.bf16.msra.mxu0 %v2701
      %2723 = vmatpush.bf16.msra.mxu0 %v2700
      %2724 = vmatpush.bf16.msra.mxu0 %v2699
      %2725 = vmatpush.bf16.msra.mxu0 %v2698
      %2726 = vmatpush.bf16.msra.mxu0 %v2697
      %2727 = vmatmul.bf16.gmra.mxu0 %v2631
      %v2728 = vpop.f32.mrf.mxu0
      %v2729 = vadd.f32 %v2655, %v2728
      %v2730 = vpop.f32.mrf.mxu0
      %2731 = vdwg.mxu0
      %2732 = vmatpush.bf16.msra.mxu0 0
      %2733 = vmatpush.bf16.msra.mxu0 0
      %2734 = vmatpush.bf16.msra.mxu0 0
      %2735 = vmatpush.bf16.msra.mxu0 0
      %2736 = vmatpush.bf16.msra.mxu0 0
      %2737 = vmatpush.bf16.msra.mxu0 0
      %2738 = vmatpush.bf16.msra.mxu0 %v2706
      %2739 = vmatpush.bf16.msra.mxu0 %v2705
      %2740 = vmatmul.bf16.gmra.mxu0 %v2717
      %v2741 = vpop.f32.mrf.mxu0
      %v2742 = vadd.f32 %v2729, %v2741
      %v2743 = vpop.f32.mrf.mxu0
      %2744 = vdwg.mxu0
      %2745 = vst [vmem:[%s590] sm:$0xff] %v2742
      %p2746 = scmp.lt.s32.totalorder %s26, 1
      %s2747 = scalar_select %p2746, %s26, 1
      %p2748 = scmp.lt.s32.totalorder %s27, 0
      %s2749 = scalar_select %p2748, %s27, 0
      %s2750 = sadd.s32 %s2749, %s2747
      %s2751 = smul.addr %s2750, 8
      %s2752 = scalar_lea.vmem %s11, %s2751
      // Predicated region
      $region65: #{model_forward.1} parent=63 // pred_check
        %p2753 = pneg %p342
      $region66: #{model_forward.1} parent=63 // pred_check_branch
        %2755 = sbr.rel (%p2753) target = $region68
      $region67: #{model_forward.1} parent=63 // pred_region
        _
      $region68: #{model_forward.1} parent=63 // pred_fallthru
        _
    $region64: #{model_forward.1} parent=5 // pred_fallthru
      _
    %p2756 = scmp.le.s32.totalorder 2, %s17
    // Predicated region
    $region69: #{model_forward.1} parent=5 // pred_check
      %p2757 = pneg %p2756
    $region70: #{model_forward.1} parent=5 // pred_check_branch
      %2759 = sbr.rel (%p2757) target = $region72
    $region71: #{model_forward.1} parent=5 // pred_region
      %s2760 = ssub.s32 %s17, 2
      // Predicated region
      $region73: #{model_forward.1} parent=71 // pred_check
        %p2761 = pneg %p348
      $region74: #{model_forward.1} parent=71 // pred_check_branch
        %2763 = sbr.rel (%p2761) target = $region76
      $region75: #{model_forward.1} parent=71 // pred_region
        %p2764 = scmp.lt.s32.totalorder %s28, 1
        %s2765 = scalar_select %p2764, %s28, 1
        %p2766 = scmp.lt.s32.totalorder %s29, 0
        %s2767 = scalar_select %p2766, %s29, 0
        %s2768 = sadd.s32 %s2767, %s2765
        %s2769 = smul.addr %s2768, 8
        %s2770 = scalar_lea.vmem %s11, %s2769
      $region76: #{model_forward.1} parent=71 // pred_fallthru
        _
    $region72: #{model_forward.1} parent=5 // pred_fallthru
      _
  $region6: #{model_forward.1} parent=0 // loop_footer
    %s21 = sadd.s32 1, %s17
  $region7: #{model_forward.1} parent=0 // loop_footer_branch
    %16 = sbr.rel target = $region3
  $region8: #{model_forward.1} parent=0 // loop_exit
    _

</llo_original>
